<compile_context>
chip_gen: v5e
topology: v5e:2x2
jax: 0.10.0
libtpu: 0.0.40
codegen_flags: <defaults>
</compile_context>

<pallas_src>
import numpy as np
import jax
import jax.numpy as jnp
from jax.experimental import pallas as pl
from jax.experimental.pallas import tpu as pltpu

# ----------------------------- model config ---------------------------------
D_IN = 3
D_OUT = 1
HIDDEN = [32, 32, 32, 32]
SKIP_IN = (2,)
BIAS = 1.0
OUT_TOTAL = D_OUT + 1 + 9 + 3 + 3            # = 17
DIMS = [D_IN] + HIDDEN + [OUT_TOTAL]         # [3, 32, 32, 32, 32, 17]
NUM_LAYERS = len(DIMS)                       # 6
NUM_LIN = NUM_LAYERS - 1                     # 5 linear layers

G = 32                                       # lanes per packed row-group (max width)
R = 4                                        # row-groups packed per 128-lane row
LANES = R * G                                # 128

SOFTPLUS_BETA = np.float32(100.0)
SOFTPLUS_INV_BETA = np.float32(1.0 / 100.0)
SOFTPLUS_THRESHOLD = np.float32(20.0)        # PyTorch Softplus default threshold


def _softplus_beta100(x):
    """PyTorch nn.Softplus(beta=100): (1/b)*log1p(exp(b*x)); linear for b*x > 20."""
    z = x * SOFTPLUS_BETA
    y = jnp.log1p(jnp.exp(jnp.minimum(z, SOFTPLUS_THRESHOLD))) * SOFTPLUS_INV_BETA
    return jnp.where(z > SOFTPLUS_THRESHOLD, x, y)


# ------------------------------ parameter init -------------------------------
def init_params(seed: int = 1234):
    """Deterministic geometric init matching ImplicitNetwork.__init__ (multires=0).

    Returns plain (in_dim, out_dim) numpy weights and 1-D numpy biases
    (effective weights; weight_norm at init is the identity)."""
    rng = np.random.default_rng(seed)
    ws, bs = [], []
    for l in range(NUM_LIN):
        in_dim = DIMS[l]
        if l + 1 in SKIP_IN:
            out_dim = DIMS[l + 1] - DIMS[0]
        else:
            out_dim = DIMS[l + 1]
        if l == NUM_LAYERS - 2:
            w = rng.normal(np.sqrt(np.pi) / np.sqrt(DIMS[l]), 0.0001,
                           size=(out_dim, in_dim)).astype(np.float32)
            b = np.full((out_dim,), -BIAS, dtype=np.float32)
        else:
            w = rng.normal(0.0, np.sqrt(2.0) / np.sqrt(out_dim),
                           size=(out_dim, in_dim)).astype(np.float32)
            b = np.zeros((out_dim,), dtype=np.float32)
        ws.append(np.ascontiguousarray(w.T))   # (in_dim, out_dim)
        bs.append(b)
    return ws, bs


def _group_pad(w):
    """Pad a (in<=32, out<=32) weight block to (32, 32) with zeros."""
    p = np.zeros((G, G), np.float32)
    p[:w.shape[0], :w.shape[1]] = w
    return p


def _block_diag4(w_gxg):
    """(32,32) block -> (128,128) block-diagonal (4 independent row-groups)."""
    out = np.zeros((LANES, LANES), np.float32)
    for g in range(R):
        out[g * G:(g + 1) * G, g * G:(g + 1) * G] = w_gxg
    return out


def _pack_input_w(w_3xg):
    """(3, 32) weight -> (12, 128) acting on the 4-point-packed input layout."""
    out = np.zeros((R * D_IN, LANES), np.float32)
    for g in range(R):
        out[g * D_IN:(g + 1) * D_IN, g * G:(g + 1) * G] = w_3xg
    return out


def pack_params(ws, bs):
    """Build packed / block-diagonal weights for the 4-points-per-row layout."""
    inv_sqrt2 = np.float32(1.0 / np.sqrt(2.0))
    h1_w = ws[1].shape[1]                                   # 29

    w0p = _pack_input_w(ws[0])                              # layer 0: 3 -> 32
    w2ip = _pack_input_w(ws[2][h1_w:, :] * inv_sqrt2)       # skip, input half (scale folded)
    w1bd = _block_diag4(_group_pad(ws[1]))                  # layer 1: 32 -> 29 (padded)
    w2xb = _block_diag4(_group_pad(ws[2][:h1_w, :] * inv_sqrt2))  # skip, hidden half
    w3bd = _block_diag4(ws[3])                              # layer 3: 32 -> 32
    w4bd = _block_diag4(_group_pad(ws[4]))                  # layer 4: 32 -> 17 (padded)

    def _pack_b(b):
        bp = np.zeros((G,), np.float32)
        bp[:b.shape[0]] = b
        return np.tile(bp, R)                               # (128,)

    w_in = jnp.asarray(np.stack([w0p, w2ip]))               # (2, 12, 128)
    w_hid = jnp.asarray(np.stack([w1bd, w2xb, w3bd, w4bd])) # (4, 128, 128)
    b_all = jnp.asarray(np.stack([_pack_b(b) for b in bs])) # (5, 128)
    return w_in, w_hid, b_all


# ------------------------------- Pallas kernel -------------------------------
def _mlp_kernel(xp_ref, w_in_ref, w_hid_ref, b_ref, o_ref):
    xp = xp_ref[...]                                   # (TP, 12)  4 points / row
    b = b_ref[...]                                     # (5, 128)

    # layer 0: packed 3 -> 32 per group
    h = jnp.dot(xp, w_in_ref[0], preferred_element_type=jnp.float32) + b[0:1]
    h = _softplus_beta100(h)
    # layer 1: 32 -> 29 (zero-padded to 32), block-diagonal over 4 groups
    h = jnp.dot(h, w_hid_ref[0], preferred_element_type=jnp.float32) + b[1:2]
    h = _softplus_beta100(h)
    # layer 2 (skip): concat replaced by two matmuls, 1/sqrt(2) folded into weights
    h = (jnp.dot(h, w_hid_ref[1], preferred_element_type=jnp.float32)
         + jnp.dot(xp, w_in_ref[1], preferred_element_type=jnp.float32)
         + b[2:3])
    h = _softplus_beta100(h)
    # layer 3: 32 -> 32
    h = jnp.dot(h, w_hid_ref[2], preferred_element_type=jnp.float32) + b[3:4]
    h = _softplus_beta100(h)
    # layer 4 (final, no softplus): 32 -> 17 padded to 32 => lane-dense (TP, 128) store
    h = jnp.dot(h, w_hid_ref[3], preferred_element_type=jnp.float32) + b[4:5]
    o_ref[...] = h.astype(o_ref.dtype)


# --------------------------------- wrapper -----------------------------------
def _round_up(a, b):
    return -(-a // b) * b


def implicit_network_forward(x, packed_params, *, tile_n=None):
    """x: (N, 3) float32 -> (N, 17) float32 via a single Pallas kernel."""
    w_in, w_hid, b_all = packed_params
    N, d_in = x.shape
    assert d_in == D_IN

    if tile_n is None:
        # Large tiles amortize the ~0.35us/step overhead; keep >= ~8 grid steps
        # so the "parallel" axis can shard across v7x's 2 TensorCores.
        tile_n = min(4096, max(512, _round_up(pl.cdiv(N, 8), 32)))
    tile_n = min(tile_n, _round_up(N, 32))
    tile_n = max(32, (tile_n // 32) * 32)      # multiple of 32 => packed rows % 8 == 0

    # TODO(synk): for huge N, mask the tail tile in-kernel instead of padding a copy.
    n_pad = (-N) % tile_n
    xp = jnp.pad(x, ((0, n_pad), (0, 0))) if n_pad else x
    Np = N + n_pad
    tile_p = tile_n // R

    # pack 4 consecutive points per row: (Np, 3) -> (Np/4, 12); pure row-major reshape
    xp = xp.reshape(Np // R, R * D_IN)

    out = pl.pallas_call(
        _mlp_kernel,
        out_shape=jax.ShapeDtypeStruct((Np // R, LANES), jnp.float32),
        grid_spec=pltpu.PrefetchScalarGridSpec(
            num_scalar_prefetch=0,
            grid=(Np // tile_n,),
            in_specs=[
                pl.BlockSpec((tile_p, R * D_IN), lambda i: (i, 0)),
                pl.BlockSpec(w_in.shape, lambda i: (0, 0, 0)),
                pl.BlockSpec(w_hid.shape, lambda i: (0, 0, 0)),
                pl.BlockSpec(b_all.shape, lambda i: (0, 0)),
            ],
            out_specs=pl.BlockSpec((tile_p, LANES), lambda i: (i, 0)),
        ),
        compiler_params=pltpu.CompilerParams(
            dimension_semantics=("parallel",)),
    )(xp, w_in, w_hid, b_all)

    # unpack: (Np/4, 128) -> (Np, 32) -> (N, 17)
    return out.reshape(Np, G)[:N, :OUT_TOTAL]


# ------------------------------ reference (JAX) ------------------------------
def reference_forward(x, ws, bs):
    """Plain-JAX forward with the original (unpacked) weights, PyTorch semantics."""
    inp = x
    h = inp
    for l in range(NUM_LIN):
        if l in SKIP_IN:
            h = jnp.concatenate([h, inp], axis=1) / np.float32(np.sqrt(2.0))
        h = h @ jnp.asarray(ws[l]) + jnp.asarray(bs[l])
        if l < NUM_LIN - 1:
            h = _softplus_beta100(h)
    return h


if __name__ == "__main__":
    key = jax.random.PRNGKey(0)
    N = 1000                                   # small, non-multiple-of-tile batch
    x = jax.random.uniform(key, (N, D_IN), dtype=jnp.float32,
                           minval=-1.0, maxval=1.0)

    ws, bs = init_params(seed=1234)
    packed = pack_params(ws, bs)

    y = implicit_network_forward(x, packed)
    y = jax.block_until_ready(y)

    y_ref = reference_forward(x, ws, bs)
    assert y.shape == (N, OUT_TOTAL)
    np.testing.assert_allclose(np.asarray(y), np.asarray(y_ref),
                               rtol=1e-4, atol=1e-5)
    print("KERNEL_OK")
</pallas_src>

<mosaic_0001>
module attributes {stable_mosaic.version = 11 : i64} {
  func.func @_mlp_kernel(%arg0: i32, %arg1: memref<128x12xf32, #tpu.memory_space<vmem>>, %arg2: memref<2x12x128xf32, #tpu.memory_space<vmem>>, %arg3: memref<4x128x128xf32, #tpu.memory_space<vmem>>, %arg4: memref<5x128xf32, #tpu.memory_space<vmem>>, %arg5: memref<128x128xf32, #tpu.memory_space<vmem>>) attributes {dimension_semantics = [#tpu.dimension_semantics<parallel>], iteration_bounds = array<i64: 2>, scalar_prefetch = 0 : i64, scratch_operands = 0 : i64, tpu.core_type = #tpu.core_type<tc>, window_params = [{transform_indices = @transform_0, window_bounds = array<i64: 128, 12>}, {pipeline_mode = #tpu.pipeline_mode<synchronous>, transform_indices = @transform_1, window_bounds = array<i64: 2, 12, 128>}, {pipeline_mode = #tpu.pipeline_mode<synchronous>, transform_indices = @transform_2, window_bounds = array<i64: 4, 128, 128>}, {pipeline_mode = #tpu.pipeline_mode<synchronous>, transform_indices = @transform_3, window_bounds = array<i64: 5, 128>}, {transform_indices = @transform_4, window_bounds = array<i64: 128, 128>}]} {
    %c0 = arith.constant 0 : index
    %c0_0 = arith.constant 0 : index
    %0 = vector.load %arg1[%c0, %c0_0] : memref<128x12xf32, #tpu.memory_space<vmem>>, vector<128x12xf32>
    %c0_1 = arith.constant 0 : index
    %c0_2 = arith.constant 0 : index
    %1 = vector.load %arg4[%c0_1, %c0_2] : memref<5x128xf32, #tpu.memory_space<vmem>>, vector<5x128xf32>
    %c0_3 = arith.constant 0 : index
    %c0_4 = arith.constant 0 : index
    %c0_5 = arith.constant 0 : index
    %2 = vector.load %arg2[%c0_3, %c0_4, %c0_5] : memref<2x12x128xf32, #tpu.memory_space<vmem>>, vector<1x12x128xf32>
    %3 = vector.shape_cast %2 : vector<1x12x128xf32> to vector<12x128xf32>
    %cst = arith.constant dense<0.000000e+00> : vector<128x128xf32>
    %4 = tpu.matmul %0, %3, %cst {dimension_numbers = #tpu.dot_dimension_numbers<[1], [0], [0], [1], [0, 0, 1, 1], [], []>} : vector<128x12xf32>, vector<12x128xf32>, vector<128x128xf32> -> vector<128x128xf32>
    %5 = vector.extract_strided_slice %1 {offsets = [0, 0], sizes = [1, 128], strides = [1, 1]} : vector<5x128xf32> to vector<1x128xf32>
    %6 = vector.broadcast %5 : vector<1x128xf32> to vector<128x128xf32>
    %7 = arith.addf %4, %6 : vector<128x128xf32>
    %cst_6 = arith.constant 1.000000e+02 : f32
    %8 = vector.broadcast %cst_6 : f32 to vector<128x128xf32>
    %9 = arith.mulf %7, %8 : vector<128x128xf32>
    %cst_7 = arith.constant 2.000000e+01 : f32
    %10 = vector.broadcast %cst_7 : f32 to vector<128x128xf32>
    %11 = arith.minimumf %9, %10 : vector<128x128xf32>
    %12 = math.exp %11 : vector<128x128xf32>
    %13 = math.log1p %12 : vector<128x128xf32>
    %cst_8 = arith.constant 0.00999999977 : f32
    %14 = vector.broadcast %cst_8 : f32 to vector<128x128xf32>
    %15 = arith.mulf %13, %14 : vector<128x128xf32>
    %cst_9 = arith.constant 2.000000e+01 : f32
    %16 = vector.broadcast %cst_9 : f32 to vector<128x128xf32>
    %17 = arith.cmpf ogt, %9, %16 : vector<128x128xf32>
    %18 = arith.select %17, %7, %15 : vector<128x128xi1>, vector<128x128xf32>
    %c0_10 = arith.constant 0 : index
    %c0_11 = arith.constant 0 : index
    %c0_12 = arith.constant 0 : index
    %19 = vector.load %arg3[%c0_10, %c0_11, %c0_12] : memref<4x128x128xf32, #tpu.memory_space<vmem>>, vector<1x128x128xf32>
    %20 = vector.shape_cast %19 : vector<1x128x128xf32> to vector<128x128xf32>
    %cst_13 = arith.constant dense<0.000000e+00> : vector<128x128xf32>
    %21 = tpu.matmul %18, %20, %cst_13 {dimension_numbers = #tpu.dot_dimension_numbers<[1], [0], [0], [1], [0, 0, 1, 1], [], []>} : vector<128x128xf32>, vector<128x128xf32>, vector<128x128xf32> -> vector<128x128xf32>
    %22 = vector.extract_strided_slice %1 {offsets = [1, 0], sizes = [1, 128], strides = [1, 1]} : vector<5x128xf32> to vector<1x128xf32>
    %23 = vector.broadcast %22 : vector<1x128xf32> to vector<128x128xf32>
    %24 = arith.addf %21, %23 : vector<128x128xf32>
    %cst_14 = arith.constant 1.000000e+02 : f32
    %25 = vector.broadcast %cst_14 : f32 to vector<128x128xf32>
    %26 = arith.mulf %24, %25 : vector<128x128xf32>
    %cst_15 = arith.constant 2.000000e+01 : f32
    %27 = vector.broadcast %cst_15 : f32 to vector<128x128xf32>
    %28 = arith.minimumf %26, %27 : vector<128x128xf32>
    %29 = math.exp %28 : vector<128x128xf32>
    %30 = math.log1p %29 : vector<128x128xf32>
    %cst_16 = arith.constant 0.00999999977 : f32
    %31 = vector.broadcast %cst_16 : f32 to vector<128x128xf32>
    %32 = arith.mulf %30, %31 : vector<128x128xf32>
    %cst_17 = arith.constant 2.000000e+01 : f32
    %33 = vector.broadcast %cst_17 : f32 to vector<128x128xf32>
    %34 = arith.cmpf ogt, %26, %33 : vector<128x128xf32>
    %35 = arith.select %34, %24, %32 : vector<128x128xi1>, vector<128x128xf32>
    %c1 = arith.constant 1 : index
    %c0_18 = arith.constant 0 : index
    %c0_19 = arith.constant 0 : index
    %36 = vector.load %arg3[%c1, %c0_18, %c0_19] : memref<4x128x128xf32, #tpu.memory_space<vmem>>, vector<1x128x128xf32>
    %37 = vector.shape_cast %36 : vector<1x128x128xf32> to vector<128x128xf32>
    %cst_20 = arith.constant dense<0.000000e+00> : vector<128x128xf32>
    %38 = tpu.matmul %35, %37, %cst_20 {dimension_numbers = #tpu.dot_dimension_numbers<[1], [0], [0], [1], [0, 0, 1, 1], [], []>} : vector<128x128xf32>, vector<128x128xf32>, vector<128x128xf32> -> vector<128x128xf32>
    %c1_21 = arith.constant 1 : index
    %c0_22 = arith.constant 0 : index
    %c0_23 = arith.constant 0 : index
    %39 = vector.load %arg2[%c1_21, %c0_22, %c0_23] : memref<2x12x128xf32, #tpu.memory_space<vmem>>, vector<1x12x128xf32>
    %40 = vector.shape_cast %39 : vector<1x12x128xf32> to vector<12x128xf32>
    %cst_24 = arith.constant dense<0.000000e+00> : vector<128x128xf32>
    %41 = tpu.matmul %0, %40, %cst_24 {dimension_numbers = #tpu.dot_dimension_numbers<[1], [0], [0], [1], [0, 0, 1, 1], [], []>} : vector<128x12xf32>, vector<12x128xf32>, vector<128x128xf32> -> vector<128x128xf32>
    %42 = arith.addf %38, %41 : vector<128x128xf32>
    %43 = vector.extract_strided_slice %1 {offsets = [2, 0], sizes = [1, 128], strides = [1, 1]} : vector<5x128xf32> to vector<1x128xf32>
    %44 = vector.broadcast %43 : vector<1x128xf32> to vector<128x128xf32>
    %45 = arith.addf %42, %44 : vector<128x128xf32>
    %cst_25 = arith.constant 1.000000e+02 : f32
    %46 = vector.broadcast %cst_25 : f32 to vector<128x128xf32>
    %47 = arith.mulf %45, %46 : vector<128x128xf32>
    %cst_26 = arith.constant 2.000000e+01 : f32
    %48 = vector.broadcast %cst_26 : f32 to vector<128x128xf32>
    %49 = arith.minimumf %47, %48 : vector<128x128xf32>
    %50 = math.exp %49 : vector<128x128xf32>
    %51 = math.log1p %50 : vector<128x128xf32>
    %cst_27 = arith.constant 0.00999999977 : f32
    %52 = vector.broadcast %cst_27 : f32 to vector<128x128xf32>
    %53 = arith.mulf %51, %52 : vector<128x128xf32>
    %cst_28 = arith.constant 2.000000e+01 : f32
    %54 = vector.broadcast %cst_28 : f32 to vector<128x128xf32>
    %55 = arith.cmpf ogt, %47, %54 : vector<128x128xf32>
    %56 = arith.select %55, %45, %53 : vector<128x128xi1>, vector<128x128xf32>
    %c2 = arith.constant 2 : index
    %c0_29 = arith.constant 0 : index
    %c0_30 = arith.constant 0 : index
    %57 = vector.load %arg3[%c2, %c0_29, %c0_30] : memref<4x128x128xf32, #tpu.memory_space<vmem>>, vector<1x128x128xf32>
    %58 = vector.shape_cast %57 : vector<1x128x128xf32> to vector<128x128xf32>
    %cst_31 = arith.constant dense<0.000000e+00> : vector<128x128xf32>
    %59 = tpu.matmul %56, %58, %cst_31 {dimension_numbers = #tpu.dot_dimension_numbers<[1], [0], [0], [1], [0, 0, 1, 1], [], []>} : vector<128x128xf32>, vector<128x128xf32>, vector<128x128xf32> -> vector<128x128xf32>
    %60 = vector.extract_strided_slice %1 {offsets = [3, 0], sizes = [1, 128], strides = [1, 1]} : vector<5x128xf32> to vector<1x128xf32>
    %61 = vector.broadcast %60 : vector<1x128xf32> to vector<128x128xf32>
    %62 = arith.addf %59, %61 : vector<128x128xf32>
    %cst_32 = arith.constant 1.000000e+02 : f32
    %63 = vector.broadcast %cst_32 : f32 to vector<128x128xf32>
    %64 = arith.mulf %62, %63 : vector<128x128xf32>
    %cst_33 = arith.constant 2.000000e+01 : f32
    %65 = vector.broadcast %cst_33 : f32 to vector<128x128xf32>
    %66 = arith.minimumf %64, %65 : vector<128x128xf32>
    %67 = math.exp %66 : vector<128x128xf32>
    %68 = math.log1p %67 : vector<128x128xf32>
    %cst_34 = arith.constant 0.00999999977 : f32
    %69 = vector.broadcast %cst_34 : f32 to vector<128x128xf32>
    %70 = arith.mulf %68, %69 : vector<128x128xf32>
    %cst_35 = arith.constant 2.000000e+01 : f32
    %71 = vector.broadcast %cst_35 : f32 to vector<128x128xf32>
    %72 = arith.cmpf ogt, %64, %71 : vector<128x128xf32>
    %73 = arith.select %72, %62, %70 : vector<128x128xi1>, vector<128x128xf32>
    %c3 = arith.constant 3 : index
    %c0_36 = arith.constant 0 : index
    %c0_37 = arith.constant 0 : index
    %74 = vector.load %arg3[%c3, %c0_36, %c0_37] : memref<4x128x128xf32, #tpu.memory_space<vmem>>, vector<1x128x128xf32>
    %75 = vector.shape_cast %74 : vector<1x128x128xf32> to vector<128x128xf32>
    %cst_38 = arith.constant dense<0.000000e+00> : vector<128x128xf32>
    %76 = tpu.matmul %73, %75, %cst_38 {dimension_numbers = #tpu.dot_dimension_numbers<[1], [0], [0], [1], [0, 0, 1, 1], [], []>} : vector<128x128xf32>, vector<128x128xf32>, vector<128x128xf32> -> vector<128x128xf32>
    %77 = vector.extract_strided_slice %1 {offsets = [4, 0], sizes = [1, 128], strides = [1, 1]} : vector<5x128xf32> to vector<1x128xf32>
    %78 = vector.broadcast %77 : vector<1x128xf32> to vector<128x128xf32>
    %79 = arith.addf %76, %78 : vector<128x128xf32>
    %c0_39 = arith.constant 0 : index
    %c0_40 = arith.constant 0 : index
    %80 = vector.load %arg5[%c0_39, %c0_40] : memref<128x128xf32, #tpu.memory_space<vmem>>, vector<128x128xf32>
    tpu.vector_store %arg5[%c0_39, %c0_40], %79 {strides = array<i32>} : memref<128x128xf32, #tpu.memory_space<vmem>>, vector<128x128xf32>,
    return
  }
  func.func @transform_0(%arg0: i32) -> (i32, i32) {
    %c0_i32 = arith.constant 0 : i32
    %c0_i32_0 = arith.constant 0 : i32
    return %arg0, %c0_i32 : i32, i32
  }
  func.func @transform_1(%arg0: i32) -> (i32, i32, i32) {
    %c0_i32 = arith.constant 0 : i32
    %c0_i32_0 = arith.constant 0 : i32
    %c0_i32_1 = arith.constant 0 : i32
    %c0_i32_2 = arith.constant 0 : i32
    return %c0_i32, %c0_i32_0, %c0_i32_1 : i32, i32, i32
  }
  func.func @transform_2(%arg0: i32) -> (i32, i32, i32) {
    %c0_i32 = arith.constant 0 : i32
    %c0_i32_0 = arith.constant 0 : i32
    %c0_i32_1 = arith.constant 0 : i32
    %c0_i32_2 = arith.constant 0 : i32
    return %c0_i32, %c0_i32_0, %c0_i32_1 : i32, i32, i32
  }
  func.func @transform_3(%arg0: i32) -> (i32, i32) {
    %c0_i32 = arith.constant 0 : i32
    %c0_i32_0 = arith.constant 0 : i32
    %c0_i32_1 = arith.constant 0 : i32
    return %c0_i32, %c0_i32_0 : i32, i32
  }
  func.func @transform_4(%arg0: i32) -> (i32, i32) {
    %c0_i32 = arith.constant 0 : i32
    %c0_i32_0 = arith.constant 0 : i32
    return %arg0, %c0_i32 : i32, i32
  }
}

</mosaic_0001>

<llo_original>
// kernel: tpu_custom_call.1
$region0: #{tpu_custom_call.1}
  #allocation0 [shape = 'u32[]', space=smem, size = 0x4, offset = 0x4, fixed_abs, tag = 'smem constant byte address 0x4 - core index']
  #allocation1 [shape = 'u32[72,128]{1,0:T(1,128)}', space=vmem, size = 0x9000, scoped, tag = 'internal scratch']
  %s0 = inlined_call_operand.vmem [shape: f32[256,12], index: 0, kind: input, shape index: {}]
  %s1 = inlined_call_operand.vmem [shape: f32[2,12,128], index: 1, kind: input, shape index: {}]
  %s2 = inlined_call_operand.hbm [shape: f32[4,128,128], index: 2, kind: input, shape index: {}]
  %s3 = inlined_call_operand.vmem [shape: f32[5,128], index: 3, kind: input, shape index: {}]
  %s4 = inlined_call_operand.hbm [shape: f32[256,128], index: 4, kind: output, shape index: {}]
  %s5 = sld [smem:[#allocation0]]
  $region53: #{tpu_custom_call.1} parent=0
    _
  %s7 = ssub.s32 1, %s5
  %s8 = scalar_select 0, %s7, %s5
  $region1: #{tpu_custom_call.1} parent=0
    #allocation2 [shape = 'u8[262144]{0}', space=vmem, size = 0x40000, scoped, tag = 'input window, operand 2, single buffered']
    #allocation3 [shape = 's32[2]{0}', space=sflag, size = 0x8, scoped, tag = 'scoped memory for tpu_custom_call.1']
    #allocation4 [shape = 's32[2]{0}', space=sflag, size = 0x8, scoped, tag = 'scoped memory for tpu_custom_call.1']
    #allocation5 [shape = 'u8[131072]{0}', space=vmem, size = 0x20000, scoped, tag = 'output window, operand 0']
    %9 = vsyncpa [#allocation3], 0
    %10 = vsyncpa [#allocation4], 0
    %s11 = scalar_lea.sflag [#allocation4], 1
    %12 = vsyncpa %s11, 0
    loop: start=0, step=1, limit=4
    $region2: #{tpu_custom_call.1} parent=1 // loop_pre_header
      _
    $region3: #{tpu_custom_call.1} parent=1 // loop_header
      %s14 = sphi 0, %s18
      %p15 = scmp.ge.s32.totalorder %s14, 4
      %s24 = sphi 0, %s26
      %s27 = sphi 0, %s24
      %s28 = sphi 0, %s27
      %s44 = sphi 0, %s28
      %s48 = sphi 0, %s48
      %s50 = sphi 0, %s48
      %s51 = sphi 0, %s50
      %s65 = sphi 0, %s51
      %s69 = sphi 0, %s69
      %s71 = sphi 0, %s69
      %s72 = sphi 0, %s71
      %s86 = sphi 0, %s72
      %s90 = sphi 0, %s90
      %s92 = sphi 0, %s90
      %s93 = sphi 0, %s92
      %s107 = sphi 0, %s93
      %s113 = sphi 0, %s115
      %s116 = sphi 0, %s113
      %s117 = sphi 0, %s116
      %s133 = sphi 0, %s117
    $region4: #{tpu_custom_call.1} parent=1 // loop_header_branch
      %17 = sbr.rel (%p15) target = $region8
    $region5: #{tpu_custom_call.1} parent=1 // loop_body
      %s19 = ssub.s32 %s14, 1
      %s20 = ssub.s32 %s14, 2
      %s21 = sadd.s32 %s14, 1
      %s22 = ssub.s32 %s14, %s21
      %p23 = scmp.eq.s32.totalorder %s22, 0
      %s25 = sadd.s32 %s24, 1
      %s26 = scalar_select %p23, %s24, %s25
      %p29 = pneg %p23
      %p30 = scmp.eq.s32.totalorder %s14, 1
      %p31 = por %p29, %p30
      %p32 = scmp.ne.s32.totalorder %s24, %s27
      %p33 = scmp.eq.s32.totalorder %s14, 0
      %p34 = por %p32, %p33
      %p35 = scmp.ne.s32.totalorder %s24, %s27
      %p36 = scmp.eq.s32.totalorder %s19, 1
      %p37 = por %p35, %p36
      %p38 = scmp.ne.s32.totalorder %s27, %s28
      %p39 = scmp.eq.s32.totalorder %s19, 0
      %p40 = por %p38, %p39
      %p41 = scmp.ne.s32.totalorder %s27, %s28
      %p42 = scmp.eq.s32.totalorder %s20, 1
      %p43 = por %p41, %p42
      %p45 = scmp.ne.s32.totalorder %s28, %s44
      %p46 = scmp.eq.s32.totalorder %s20, 0
      %p47 = por %p45, %p46
      %s49 = sadd.s32 %s48, 1
      %p52 = scmp.eq.s32.totalorder %s14, 1
      %p53 = scmp.ne.s32.totalorder %s48, %s50
      %p54 = scmp.eq.s32.totalorder %s14, 0
      %p55 = por %p53, %p54
      %p56 = scmp.ne.s32.totalorder %s48, %s50
      %p57 = scmp.eq.s32.totalorder %s19, 1
      %p58 = por %p56, %p57
      %p59 = scmp.ne.s32.totalorder %s50, %s51
      %p60 = scmp.eq.s32.totalorder %s19, 0
      %p61 = por %p59, %p60
      %p62 = scmp.ne.s32.totalorder %s50, %s51
      %p63 = scmp.eq.s32.totalorder %s20, 1
      %p64 = por %p62, %p63
      %p66 = scmp.ne.s32.totalorder %s51, %s65
      %p67 = scmp.eq.s32.totalorder %s20, 0
      %p68 = por %p66, %p67
      %s70 = sadd.s32 %s69, 1
      %p73 = scmp.eq.s32.totalorder %s14, 1
      %p74 = scmp.ne.s32.totalorder %s69, %s71
      %p75 = scmp.eq.s32.totalorder %s14, 0
      %p76 = por %p74, %p75
      %p77 = scmp.ne.s32.totalorder %s69, %s71
      %p78 = scmp.eq.s32.totalorder %s19, 1
      %p79 = por %p77, %p78
      %p80 = scmp.ne.s32.totalorder %s71, %s72
      %p81 = scmp.eq.s32.totalorder %s19, 0
      %p82 = por %p80, %p81
      %p83 = scmp.ne.s32.totalorder %s71, %s72
      %p84 = scmp.eq.s32.totalorder %s20, 1
      %p85 = por %p83, %p84
      %p87 = scmp.ne.s32.totalorder %s72, %s86
      %p88 = scmp.eq.s32.totalorder %s20, 0
      %p89 = por %p87, %p88
      %s91 = sadd.s32 %s90, 1
      %p94 = scmp.eq.s32.totalorder %s14, 1
      %p95 = scmp.ne.s32.totalorder %s90, %s92
      %p96 = scmp.eq.s32.totalorder %s14, 0
      %p97 = por %p95, %p96
      %p98 = scmp.ne.s32.totalorder %s90, %s92
      %p99 = scmp.eq.s32.totalorder %s19, 1
      %p100 = por %p98, %p99
      %p101 = scmp.ne.s32.totalorder %s92, %s93
      %p102 = scmp.eq.s32.totalorder %s19, 0
      %p103 = por %p101, %p102
      %p104 = scmp.ne.s32.totalorder %s92, %s93
      %p105 = scmp.eq.s32.totalorder %s20, 1
      %p106 = por %p104, %p105
      %p108 = scmp.ne.s32.totalorder %s93, %s107
      %p109 = scmp.eq.s32.totalorder %s20, 0
      %p110 = por %p108, %p109
      %s111 = ssub.s32 %s14, %s21
      %p112 = scmp.eq.s32.totalorder %s111, 0
      %s114 = sadd.s32 %s113, 1
      %s115 = scalar_select %p112, %s113, %s114
      %p118 = pneg %p112
      %p119 = scmp.eq.s32.totalorder %s14, 1
      %p120 = por %p118, %p119
      %p121 = scmp.ne.s32.totalorder %s113, %s116
      %p122 = scmp.eq.s32.totalorder %s14, 0
      %p123 = por %p121, %p122
      %p124 = scmp.ne.s32.totalorder %s113, %s116
      %p125 = scmp.eq.s32.totalorder %s19, 1
      %p126 = por %p124, %p125
      %p127 = scmp.ne.s32.totalorder %s116, %s117
      %p128 = scmp.eq.s32.totalorder %s19, 0
      %p129 = por %p127, %p128
      %p130 = scmp.ne.s32.totalorder %s116, %s117
      %p131 = scmp.eq.s32.totalorder %s20, 1
      %p132 = por %p130, %p131
      %p134 = scmp.ne.s32.totalorder %s117, %s133
      %p135 = scmp.eq.s32.totalorder %s20, 0
      %p136 = por %p134, %p135
      %p137 = scmp.le.s32.totalorder 1, %s14
      %p138 = scmp.lt.s32.totalorder %s14, 3
      %p139 = pnand %p137, %p138
      %p140 = pneg %p139
      // Predicated region
      $region9: #{tpu_custom_call.1} parent=5 // pred_check
        _
      $region10: #{tpu_custom_call.1} parent=5 // pred_check_branch
        %142 = sbr.rel (%p139) target = $region12
      $region11: #{tpu_custom_call.1} parent=5 // pred_region
        %s143 = ssub.s32 %s14, 1
        // Predicated region
        $region13: #{tpu_custom_call.1} parent=11 // pred_check
          %p144 = pneg %p61
        $region14: #{tpu_custom_call.1} parent=11 // pred_check_branch
          %146 = sbr.rel (%p144) target = $region16
        $region15: #{tpu_custom_call.1} parent=11 // pred_region
          _
        $region16: #{tpu_custom_call.1} parent=11 // pred_fallthru
          _
        // Predicated region
        $region17: #{tpu_custom_call.1} parent=11 // pred_check
          %p147 = pneg %p82
        $region18: #{tpu_custom_call.1} parent=11 // pred_check_branch
          %149 = sbr.rel (%p147) target = $region20
        $region19: #{tpu_custom_call.1} parent=11 // pred_region
          %151 = vsyncadd [#allocation3], 0
          %s152 = sshll.u32 %s2, 4
          %s153 = int_to_ptr.hbm [resolvable:$true] %s152
          %s154 = sshll.u32 [#allocation2], 4
          %s155 = int_to_ptr.vmem [resolvable:$true] %s154
          %160 = dma.hbm_to_vmem [thread:$0]  %s153, 8192, %s155, [#allocation3], 128, 128, 8
        $region20: #{tpu_custom_call.1} parent=11 // pred_fallthru
          _
        // Predicated region
        $region21: #{tpu_custom_call.1} parent=11 // pred_check
          %p161 = pneg %p103
        $region22: #{tpu_custom_call.1} parent=11 // pred_check_branch
          %163 = sbr.rel (%p161) target = $region24
        $region23: #{tpu_custom_call.1} parent=11 // pred_region
          _
        $region24: #{tpu_custom_call.1} parent=11 // pred_fallthru
          _
      $region12: #{tpu_custom_call.1} parent=5 // pred_fallthru
        _
      %p164 = scmp.lt.s32.totalorder %s14, 2
      // Predicated region
      $region25: #{tpu_custom_call.1} parent=5 // pred_check
        %p165 = pneg %p164
      $region26: #{tpu_custom_call.1} parent=5 // pred_check_branch
        %167 = sbr.rel (%p165) target = $region28
      $region27: #{tpu_custom_call.1} parent=5 // pred_region
        // Predicated region
        $region29: #{tpu_custom_call.1} parent=27 // pred_check
          %p168 = pneg %p34
        $region30: #{tpu_custom_call.1} parent=27 // pred_check_branch
          %170 = sbr.rel (%p168) target = $region32
        $region31: #{tpu_custom_call.1} parent=27 // pred_region
          %s171 = smul.u32 16, %s14
          %p172 = scmp.lt.s32.totalorder %s171, 31
          %s173 = scalar_select %p172, %s171, 31
          %s174 = smul.addr %s173, 8
          %s175 = scalar_lea.vmem %s0, %s174
          %s176 = smul.u32 16, %s14
        $region32: #{tpu_custom_call.1} parent=27 // pred_fallthru
          _
      $region28: #{tpu_custom_call.1} parent=5 // pred_fallthru
        _
      %p177 = scmp.le.s32.totalorder 1, %s14
      %p178 = scmp.lt.s32.totalorder %s14, 3
      %p179 = pnand %p177, %p178
      %p180 = pneg %p179
      // Predicated region
      $region33: #{tpu_custom_call.1} parent=5 // pred_check
        _
      $region34: #{tpu_custom_call.1} parent=5 // pred_check_branch
        %182 = sbr.rel (%p179) target = $region36
      $region35: #{tpu_custom_call.1} parent=5 // pred_region
        %s183 = ssub.s32 %s14, 1
        // Predicated region
        $region37: #{tpu_custom_call.1} parent=35 // pred_check
          %p184 = pneg %p82
        $region38: #{tpu_custom_call.1} parent=35 // pred_check_branch
          %186 = sbr.rel (%p184) target = $region40
        $region39: #{tpu_custom_call.1} parent=35 // pred_region
          %188 = dma.done [#allocation3], 8192
        $region40: #{tpu_custom_call.1} parent=35 // pred_fallthru
          _
        %s189 = smul.u32 16, %s19
        %p190 = scmp.lt.s32.totalorder %s189, 31
        %s191 = scalar_select %p190, %s189, 31
        %s192 = smul.addr %s191, 8
        %s193 = scalar_lea.vmem %s0, %s192
        %p194 = pneg %p40
        %p195 = pneg %p37
        %p196 = pneg %p61
        %p197 = pneg %p58
        %p198 = pneg %p82
        %p199 = pneg %p79
        %p200 = pneg %p103
        %p201 = pneg %p100
        %p202 = pneg %p129
        %p203 = pneg %p126
        %s204 = sand.u32 %s116, 1
        %s205 = scalar_lea.sflag [#allocation4], %s204
        %s206 = sand.u32 %s116, 1
        %s207 = smul.addr %s206, 128
        %s208 = scalar_lea.vmem [#allocation5], %s207
        %s209 = smul.u32 16, %s19
        %p210 = scmp.lt.s32.totalorder %s209, 31
        %s211 = scalar_select %p210, %s209, 31
        %s212 = smul.addr %s211, 8
        %s213 = scalar_lea.vmem %s0, %s212
        %s214 = smul.u32 16, %s19
        %s215 = smul.u32 16, %s19
        %v216 = vld [vmem:[%s213] sm:$0xff]
        %v217 = vld [vmem:[%s213 + $0x8] sm:$0xff]
        %v218 = vld [vmem:[%s213 + $0x10] sm:$0xff]
        %v219 = vld [vmem:[%s213 + $0x18] sm:$0xff]
        %v220 = vld [vmem:[%s213 + $0x20] sm:$0xff]
        %v221 = vld [vmem:[%s213 + $0x28] sm:$0xff]
        %v222 = vld [vmem:[%s213 + $0x30] sm:$0xff]
        %v223 = vld [vmem:[%s213 + $0x38] sm:$0xff]
        %v224 = vld [vmem:[%s213 + $0x40] sm:$0xff]
        %v225 = vld [vmem:[%s213 + $0x48] sm:$0xff]
        %v226 = vld [vmem:[%s213 + $0x50] sm:$0xff]
        %v227 = vld [vmem:[%s213 + $0x58] sm:$0xff]
        %v228 = vld [vmem:[%s213 + $0x60] sm:$0xff]
        %v229 = vld [vmem:[%s213 + $0x68] sm:$0xff]
        %v230 = vld [vmem:[%s213 + $0x70] sm:$0xff]
        %v231 = vld [vmem:[%s213 + $0x78] sm:$0xff]
        %v232 = vld [vmem:[%s3] sm:$0x1f]
        %v233 = vld [vmem:[%s1] sm:$0xff]
        %v234 = vld [vmem:[%s1 + $0x8] sm:$0xf]
        %v235 = vperm.slane %v232, 0
        %vm236 = vcmask 97280
        %v238 = vsel %vm236, %v216, 0
        %v241 = vsel %vm236, %v217, 0
        %v244 = vsel %vm236, %v218, 0
        %v247 = vsel %vm236, %v219, 0
        %v250 = vsel %vm236, %v220, 0
        %v253 = vsel %vm236, %v221, 0
        %v256 = vsel %vm236, %v222, 0
        %v259 = vsel %vm236, %v223, 0
        %v262 = vsel %vm236, %v224, 0
        %v265 = vsel %vm236, %v225, 0
        %v268 = vsel %vm236, %v226, 0
        %v271 = vsel %vm236, %v227, 0
        %v274 = vsel %vm236, %v228, 0
        %v277 = vsel %vm236, %v229, 0
        %v280 = vsel %vm236, %v230, 0
        %v283 = vsel %vm236, %v231, 0
        %vm285 = vcmask 1043456
        %v287 = vsel %vm285, %v234, 0
        %289 = vmatpush.msra.mxu0 0.0
        %290 = vmatpush.msra.mxu0 0.0
        %291 = vmatpush.msra.mxu0 0.0
        %292 = vmatpush.msra.mxu0 0.0
        %293 = vmatpush.msra.mxu0 0.0
        %294 = vmatpush.msra.mxu0 0.0
        %295 = vmatpush.msra.mxu0 0.0
        %296 = vmatpush.msra.mxu0 0.0
        %297 = vmatpush.msra.mxu0 0.0
        %298 = vmatpush.msra.mxu0 0.0
        %299 = vmatpush.msra.mxu0 0.0
        %300 = vmatpush.msra.mxu0 0.0
        %301 = vmatpush.msra.mxu0 0.0
        %302 = vmatpush.msra.mxu0 0.0
        %303 = vmatpush.msra.mxu0 %v287
        %304 = vmatpush.msra.mxu0 %v233
        %305 = vmatmul.f32.gmra.mxu0 %v238
        %v306 = vpop.f32.mrf.mxu0
        %v307 = vadd.f32 %v235, %v306
        %308 = vmatmul.f32.gmra.mxu0 %v241
        %v309 = vpop.f32.mrf.mxu0
        %v310 = vadd.f32 %v235, %v309
        %311 = vmatmul.f32.gmra.mxu0 %v244
        %v312 = vpop.f32.mrf.mxu0
        %v313 = vadd.f32 %v235, %v312
        %314 = vmatmul.f32.gmra.mxu0 %v247
        %v315 = vpop.f32.mrf.mxu0
        %v316 = vadd.f32 %v235, %v315
        %317 = vmatmul.f32.gmra.mxu0 %v250
        %v318 = vpop.f32.mrf.mxu0
        %v319 = vadd.f32 %v235, %v318
        %320 = vmatmul.f32.gmra.mxu0 %v253
        %v321 = vpop.f32.mrf.mxu0
        %v322 = vadd.f32 %v235, %v321
        %323 = vmatmul.f32.gmra.mxu0 %v256
        %v324 = vpop.f32.mrf.mxu0
        %v325 = vadd.f32 %v235, %v324
        %326 = vmatmul.f32.gmra.mxu0 %v259
        %v327 = vpop.f32.mrf.mxu0
        %v328 = vadd.f32 %v235, %v327
        %329 = vmatmul.f32.gmra.mxu0 %v262
        %v330 = vpop.f32.mrf.mxu0
        %v331 = vadd.f32 %v235, %v330
        %332 = vmatmul.f32.gmra.mxu0 %v265
        %v333 = vpop.f32.mrf.mxu0
        %v334 = vadd.f32 %v235, %v333
        %335 = vmatmul.f32.gmra.mxu0 %v268
        %v336 = vpop.f32.mrf.mxu0
        %v337 = vadd.f32 %v235, %v336
        %338 = vmatmul.f32.gmra.mxu0 %v271
        %v339 = vpop.f32.mrf.mxu0
        %v340 = vadd.f32 %v235, %v339
        %341 = vmatmul.f32.gmra.mxu0 %v274
        %v342 = vpop.f32.mrf.mxu0
        %v343 = vadd.f32 %v235, %v342
        %344 = vmatmul.f32.gmra.mxu0 %v277
        %v345 = vpop.f32.mrf.mxu0
        %v346 = vadd.f32 %v235, %v345
        %347 = vmatmul.f32.gmra.mxu0 %v280
        %v348 = vpop.f32.mrf.mxu0
        %v349 = vadd.f32 %v235, %v348
        %350 = vmatmul.f32.gmra.mxu0 %v283
        %v351 = vpop.f32.mrf.mxu0
        %v352 = vadd.f32 %v235, %v351
        %353 = vdwg.mxu0
        %v354 = vmul.f32 %v307, 100.0
        %v355 = vmul.f32 %v310, 100.0
        %v356 = vmul.f32 %v313, 100.0
        %v357 = vmul.f32 %v316, 100.0
        %v358 = vmul.f32 %v319, 100.0
        %v359 = vmul.f32 %v322, 100.0
        %v360 = vmul.f32 %v325, 100.0
        %v361 = vmul.f32 %v328, 100.0
        %v362 = vmul.f32 %v331, 100.0
        %v363 = vmul.f32 %v334, 100.0
        %v364 = vmul.f32 %v337, 100.0
        %v365 = vmul.f32 %v340, 100.0
        %v366 = vmul.f32 %v343, 100.0
        %v367 = vmul.f32 %v346, 100.0
        %v368 = vmul.f32 %v349, 100.0
        %v369 = vmul.f32 %v352, 100.0
        %v370 = vmin.f32 %v354, 20.0
        %v371 = vmin.f32 %v355, 20.0
        %v372 = vmin.f32 %v356, 20.0
        %v373 = vmin.f32 %v357, 20.0
        %v374 = vmin.f32 %v358, 20.0
        %v375 = vmin.f32 %v359, 20.0
        %v376 = vmin.f32 %v360, 20.0
        %v377 = vmin.f32 %v361, 20.0
        %v378 = vmin.f32 %v362, 20.0
        %v379 = vmin.f32 %v363, 20.0
        %v380 = vmin.f32 %v364, 20.0
        %v381 = vmin.f32 %v365, 20.0
        %v382 = vmin.f32 %v366, 20.0
        %v383 = vmin.f32 %v367, 20.0
        %v384 = vmin.f32 %v368, 20.0
        %v385 = vmin.f32 %v369, 20.0
        %v386 = vmul.f32 %v370, 1.442695
        %v387 = vpow.pop %v386
        %v388 = vmul.f32 %v371, 1.442695
        %v389 = vpow.pop %v388
        %v390 = vmul.f32 %v372, 1.442695
        %v391 = vpow.pop %v390
        %v392 = vmul.f32 %v373, 1.442695
        %v393 = vpow.pop %v392
        %v394 = vmul.f32 %v374, 1.442695
        %v395 = vpow.pop %v394
        %v396 = vmul.f32 %v375, 1.442695
        %v397 = vpow.pop %v396
        %v398 = vmul.f32 %v376, 1.442695
        %v399 = vpow.pop %v398
        %v400 = vmul.f32 %v377, 1.442695
        %v401 = vpow.pop %v400
        %v402 = vmul.f32 %v378, 1.442695
        %v403 = vpow.pop %v402
        %v404 = vmul.f32 %v379, 1.442695
        %v405 = vpow.pop %v404
        %v406 = vmul.f32 %v380, 1.442695
        %v407 = vpow.pop %v406
        %v408 = vmul.f32 %v381, 1.442695
        %v409 = vpow.pop %v408
        %v410 = vmul.f32 %v382, 1.442695
        %v411 = vpow.pop %v410
        %v412 = vmul.f32 %v383, 1.442695
        %v413 = vpow.pop %v412
        %v414 = vmul.f32 %v384, 1.442695
        %v415 = vpow.pop %v414
        %v416 = vmul.f32 %v385, 1.442695
        %v417 = vpow.pop %v416
        %v418 = vadd.f32 %v387, 1.0
        %v419 = vlog2.pop %v418
        %v420 = vmul.f32 %v419, 0.6931472
        %v421 = vmul.f32 -0.5, %v387
        %v422 = vadd.f32 %v421, 1.0
        %v423 = vmul.f32 %v422, %v387
        %v424 = vand.u32 2147483647, %v387
        %vm425 = vcmp.lt.f32.partialorder %v424, 0.0004427343
        %v426 = vsel %vm425, %v423, %v420
        %v427 = vadd.f32 %v389, 1.0
        %v428 = vlog2.pop %v427
        %v429 = vmul.f32 %v428, 0.6931472
        %v430 = vmul.f32 -0.5, %v389
        %v431 = vadd.f32 %v430, 1.0
        %v432 = vmul.f32 %v431, %v389
        %v433 = vand.u32 2147483647, %v389
        %vm434 = vcmp.lt.f32.partialorder %v433, 0.0004427343
        %v435 = vsel %vm434, %v432, %v429
        %v436 = vadd.f32 %v391, 1.0
        %v437 = vlog2.pop %v436
        %v438 = vmul.f32 %v437, 0.6931472
        %v439 = vmul.f32 -0.5, %v391
        %v440 = vadd.f32 %v439, 1.0
        %v441 = vmul.f32 %v440, %v391
        %v442 = vand.u32 2147483647, %v391
        %vm443 = vcmp.lt.f32.partialorder %v442, 0.0004427343
        %v444 = vsel %vm443, %v441, %v438
        %v445 = vadd.f32 %v393, 1.0
        %v446 = vlog2.pop %v445
        %v447 = vmul.f32 %v446, 0.6931472
        %v448 = vmul.f32 -0.5, %v393
        %v449 = vadd.f32 %v448, 1.0
        %v450 = vmul.f32 %v449, %v393
        %v451 = vand.u32 2147483647, %v393
        %vm452 = vcmp.lt.f32.partialorder %v451, 0.0004427343
        %v453 = vsel %vm452, %v450, %v447
        %v454 = vadd.f32 %v395, 1.0
        %v455 = vlog2.pop %v454
        %v456 = vmul.f32 %v455, 0.6931472
        %v457 = vmul.f32 -0.5, %v395
        %v458 = vadd.f32 %v457, 1.0
        %v459 = vmul.f32 %v458, %v395
        %v460 = vand.u32 2147483647, %v395
        %vm461 = vcmp.lt.f32.partialorder %v460, 0.0004427343
        %v462 = vsel %vm461, %v459, %v456
        %v463 = vadd.f32 %v397, 1.0
        %v464 = vlog2.pop %v463
        %v465 = vmul.f32 %v464, 0.6931472
        %v466 = vmul.f32 -0.5, %v397
        %v467 = vadd.f32 %v466, 1.0
        %v468 = vmul.f32 %v467, %v397
        %v469 = vand.u32 2147483647, %v397
        %vm470 = vcmp.lt.f32.partialorder %v469, 0.0004427343
        %v471 = vsel %vm470, %v468, %v465
        %v472 = vadd.f32 %v399, 1.0
        %v473 = vlog2.pop %v472
        %v474 = vmul.f32 %v473, 0.6931472
        %v475 = vmul.f32 -0.5, %v399
        %v476 = vadd.f32 %v475, 1.0
        %v477 = vmul.f32 %v476, %v399
        %v478 = vand.u32 2147483647, %v399
        %vm479 = vcmp.lt.f32.partialorder %v478, 0.0004427343
        %v480 = vsel %vm479, %v477, %v474
        %v481 = vadd.f32 %v401, 1.0
        %v482 = vlog2.pop %v481
        %v483 = vmul.f32 %v482, 0.6931472
        %v484 = vmul.f32 -0.5, %v401
        %v485 = vadd.f32 %v484, 1.0
        %v486 = vmul.f32 %v485, %v401
        %v487 = vand.u32 2147483647, %v401
        %vm488 = vcmp.lt.f32.partialorder %v487, 0.0004427343
        %v489 = vsel %vm488, %v486, %v483
        %v490 = vadd.f32 %v403, 1.0
        %v491 = vlog2.pop %v490
        %v492 = vmul.f32 %v491, 0.6931472
        %v493 = vmul.f32 -0.5, %v403
        %v494 = vadd.f32 %v493, 1.0
        %v495 = vmul.f32 %v494, %v403
        %v496 = vand.u32 2147483647, %v403
        %vm497 = vcmp.lt.f32.partialorder %v496, 0.0004427343
        %v498 = vsel %vm497, %v495, %v492
        %v499 = vadd.f32 %v405, 1.0
        %v500 = vlog2.pop %v499
        %v501 = vmul.f32 %v500, 0.6931472
        %v502 = vmul.f32 -0.5, %v405
        %v503 = vadd.f32 %v502, 1.0
        %v504 = vmul.f32 %v503, %v405
        %v505 = vand.u32 2147483647, %v405
        %vm506 = vcmp.lt.f32.partialorder %v505, 0.0004427343
        %v507 = vsel %vm506, %v504, %v501
        %v508 = vadd.f32 %v407, 1.0
        %v509 = vlog2.pop %v508
        %v510 = vmul.f32 %v509, 0.6931472
        %v511 = vmul.f32 -0.5, %v407
        %v512 = vadd.f32 %v511, 1.0
        %v513 = vmul.f32 %v512, %v407
        %v514 = vand.u32 2147483647, %v407
        %vm515 = vcmp.lt.f32.partialorder %v514, 0.0004427343
        %v516 = vsel %vm515, %v513, %v510
        %v517 = vadd.f32 %v409, 1.0
        %v518 = vlog2.pop %v517
        %v519 = vmul.f32 %v518, 0.6931472
        %v520 = vmul.f32 -0.5, %v409
        %v521 = vadd.f32 %v520, 1.0
        %v522 = vmul.f32 %v521, %v409
        %v523 = vand.u32 2147483647, %v409
        %vm524 = vcmp.lt.f32.partialorder %v523, 0.0004427343
        %v525 = vsel %vm524, %v522, %v519
        %v526 = vadd.f32 %v411, 1.0
        %v527 = vlog2.pop %v526
        %v528 = vmul.f32 %v527, 0.6931472
        %v529 = vmul.f32 -0.5, %v411
        %v530 = vadd.f32 %v529, 1.0
        %v531 = vmul.f32 %v530, %v411
        %v532 = vand.u32 2147483647, %v411
        %vm533 = vcmp.lt.f32.partialorder %v532, 0.0004427343
        %v534 = vsel %vm533, %v531, %v528
        %v535 = vadd.f32 %v413, 1.0
        %v536 = vlog2.pop %v535
        %v537 = vmul.f32 %v536, 0.6931472
        %v538 = vmul.f32 -0.5, %v413
        %v539 = vadd.f32 %v538, 1.0
        %v540 = vmul.f32 %v539, %v413
        %v541 = vand.u32 2147483647, %v413
        %vm542 = vcmp.lt.f32.partialorder %v541, 0.0004427343
        %v543 = vsel %vm542, %v540, %v537
        %v544 = vadd.f32 %v415, 1.0
        %v545 = vlog2.pop %v544
        %v546 = vmul.f32 %v545, 0.6931472
        %v547 = vmul.f32 -0.5, %v415
        %v548 = vadd.f32 %v547, 1.0
        %v549 = vmul.f32 %v548, %v415
        %v550 = vand.u32 2147483647, %v415
        %vm551 = vcmp.lt.f32.partialorder %v550, 0.0004427343
        %v552 = vsel %vm551, %v549, %v546
        %v553 = vadd.f32 %v417, 1.0
        %v554 = vlog2.pop %v553
        %v555 = vmul.f32 %v554, 0.6931472
        %v556 = vmul.f32 -0.5, %v417
        %v557 = vadd.f32 %v556, 1.0
        %v558 = vmul.f32 %v557, %v417
        %v559 = vand.u32 2147483647, %v417
        %vm560 = vcmp.lt.f32.partialorder %v559, 0.0004427343
        %v561 = vsel %vm560, %v558, %v555
        %v562 = vmul.f32 %v426, 0.01
        %v563 = vmul.f32 %v435, 0.01
        %v564 = vmul.f32 %v444, 0.01
        %v565 = vmul.f32 %v453, 0.01
        %v566 = vmul.f32 %v462, 0.01
        %v567 = vmul.f32 %v471, 0.01
        %v568 = vmul.f32 %v480, 0.01
        %v569 = vmul.f32 %v489, 0.01
        %v570 = vmul.f32 %v498, 0.01
        %v571 = vmul.f32 %v507, 0.01
        %v572 = vmul.f32 %v516, 0.01
        %v573 = vmul.f32 %v525, 0.01
        %v574 = vmul.f32 %v534, 0.01
        %v575 = vmul.f32 %v543, 0.01
        %v576 = vmul.f32 %v552, 0.01
        %v577 = vmul.f32 %v561, 0.01
        %vm578 = vcmp.gt.f32.partialorder %v354, 20.0
        %vm579 = vcmp.gt.f32.partialorder %v355, 20.0
        %vm580 = vcmp.gt.f32.partialorder %v356, 20.0
        %vm581 = vcmp.gt.f32.partialorder %v357, 20.0
        %vm582 = vcmp.gt.f32.partialorder %v358, 20.0
        %vm583 = vcmp.gt.f32.partialorder %v359, 20.0
        %vm584 = vcmp.gt.f32.partialorder %v360, 20.0
        %vm585 = vcmp.gt.f32.partialorder %v361, 20.0
        %vm586 = vcmp.gt.f32.partialorder %v362, 20.0
        %vm587 = vcmp.gt.f32.partialorder %v363, 20.0
        %vm588 = vcmp.gt.f32.partialorder %v364, 20.0
        %vm589 = vcmp.gt.f32.partialorder %v365, 20.0
        %vm590 = vcmp.gt.f32.partialorder %v366, 20.0
        %vm591 = vcmp.gt.f32.partialorder %v367, 20.0
        %vm592 = vcmp.gt.f32.partialorder %v368, 20.0
        %vm593 = vcmp.gt.f32.partialorder %v369, 20.0
        %v594 = vsel %vm578, %v307, %v562
        %v595 = vsel %vm579, %v310, %v563
        %v596 = vsel %vm580, %v313, %v564
        %v597 = vsel %vm581, %v316, %v565
        %v598 = vsel %vm582, %v319, %v566
        %v599 = vsel %vm583, %v322, %v567
        %v600 = vsel %vm584, %v325, %v568
        %v601 = vsel %vm585, %v328, %v569
        %v602 = vsel %vm586, %v331, %v570
        %v603 = vsel %vm587, %v334, %v571
        %v604 = vsel %vm588, %v337, %v572
        %v605 = vsel %vm589, %v340, %v573
        %v606 = vsel %vm590, %v343, %v574
        %v607 = vsel %vm591, %v346, %v575
        %v608 = vsel %vm592, %v349, %v576
        %v609 = vsel %vm593, %v352, %v577
        %v610 = vld [vmem:[#allocation2] sm:$0xff]
        %v611 = vld [vmem:[#allocation2 + $0x8] sm:$0xff]
        %v612 = vld [vmem:[#allocation2 + $0x10] sm:$0xff]
        %v613 = vld [vmem:[#allocation2 + $0x18] sm:$0xff]
        %v614 = vld [vmem:[#allocation2 + $0x20] sm:$0xff]
        %v615 = vld [vmem:[#allocation2 + $0x28] sm:$0xff]
        %v616 = vld [vmem:[#allocation2 + $0x30] sm:$0xff]
        %v617 = vld [vmem:[#allocation2 + $0x38] sm:$0xff]
        %v618 = vld [vmem:[#allocation2 + $0x40] sm:$0xff]
        %v619 = vld [vmem:[#allocation2 + $0x48] sm:$0xff]
        %v620 = vld [vmem:[#allocation2 + $0x50] sm:$0xff]
        %v621 = vld [vmem:[#allocation2 + $0x58] sm:$0xff]
        %v622 = vld [vmem:[#allocation2 + $0x60] sm:$0xff]
        %v623 = vld [vmem:[#allocation2 + $0x68] sm:$0xff]
        %v624 = vld [vmem:[#allocation2 + $0x70] sm:$0xff]
        %v625 = vld [vmem:[#allocation2 + $0x78] sm:$0xff]
        %v626 = vperm.slane %v232, 1
        %627 = vmatpush.msra.mxu0 %v625
        %628 = vmatpush.msra.mxu0 %v624
        %629 = vmatpush.msra.mxu0 %v623
        %630 = vmatpush.msra.mxu0 %v622
        %631 = vmatpush.msra.mxu0 %v621
        %632 = vmatpush.msra.mxu0 %v620
        %633 = vmatpush.msra.mxu0 %v619
        %634 = vmatpush.msra.mxu0 %v618
        %635 = vmatpush.msra.mxu0 %v617
        %636 = vmatpush.msra.mxu0 %v616
        %637 = vmatpush.msra.mxu0 %v615
        %638 = vmatpush.msra.mxu0 %v614
        %639 = vmatpush.msra.mxu0 %v613
        %640 = vmatpush.msra.mxu0 %v612
        %641 = vmatpush.msra.mxu0 %v611
        %642 = vmatpush.msra.mxu0 %v610
        %643 = vmatmul.f32.gmra.mxu0 %v594
        %v644 = vpop.f32.mrf.mxu0
        %v645 = vadd.f32 %v626, %v644
        %646 = vmatmul.f32.gmra.mxu0 %v595
        %v647 = vpop.f32.mrf.mxu0
        %v648 = vadd.f32 %v626, %v647
        %649 = vmatmul.f32.gmra.mxu0 %v596
        %v650 = vpop.f32.mrf.mxu0
        %v651 = vadd.f32 %v626, %v650
        %652 = vmatmul.f32.gmra.mxu0 %v597
        %v653 = vpop.f32.mrf.mxu0
        %v654 = vadd.f32 %v626, %v653
        %655 = vmatmul.f32.gmra.mxu0 %v598
        %v656 = vpop.f32.mrf.mxu0
        %v657 = vadd.f32 %v626, %v656
        %658 = vmatmul.f32.gmra.mxu0 %v599
        %v659 = vpop.f32.mrf.mxu0
        %v660 = vadd.f32 %v626, %v659
        %661 = vmatmul.f32.gmra.mxu0 %v600
        %v662 = vpop.f32.mrf.mxu0
        %v663 = vadd.f32 %v626, %v662
        %664 = vmatmul.f32.gmra.mxu0 %v601
        %v665 = vpop.f32.mrf.mxu0
        %v666 = vadd.f32 %v626, %v665
        %667 = vmatmul.f32.gmra.mxu0 %v602
        %v668 = vpop.f32.mrf.mxu0
        %v669 = vadd.f32 %v626, %v668
        %670 = vmatmul.f32.gmra.mxu0 %v603
        %v671 = vpop.f32.mrf.mxu0
        %v672 = vadd.f32 %v626, %v671
        %673 = vmatmul.f32.gmra.mxu0 %v604
        %v674 = vpop.f32.mrf.mxu0
        %v675 = vadd.f32 %v626, %v674
        %676 = vmatmul.f32.gmra.mxu0 %v605
        %v677 = vpop.f32.mrf.mxu0
        %v678 = vadd.f32 %v626, %v677
        %679 = vmatmul.f32.gmra.mxu0 %v606
        %v680 = vpop.f32.mrf.mxu0
        %v681 = vadd.f32 %v626, %v680
        %682 = vmatmul.f32.gmra.mxu0 %v607
        %v683 = vpop.f32.mrf.mxu0
        %v684 = vadd.f32 %v626, %v683
        %685 = vmatmul.f32.gmra.mxu0 %v608
        %v686 = vpop.f32.mrf.mxu0
        %v687 = vadd.f32 %v626, %v686
        %688 = vmatmul.f32.gmra.mxu0 %v609
        %v689 = vpop.f32.mrf.mxu0
        %v690 = vadd.f32 %v626, %v689
        %691 = vdwg.mxu0
        %v692 = vmul.f32 %v645, 100.0
        %v693 = vmul.f32 %v648, 100.0
        %v694 = vmul.f32 %v651, 100.0
        %v695 = vmul.f32 %v654, 100.0
        %v696 = vmul.f32 %v657, 100.0
        %v697 = vmul.f32 %v660, 100.0
        %v698 = vmul.f32 %v663, 100.0
        %v699 = vmul.f32 %v666, 100.0
        %v700 = vmul.f32 %v669, 100.0
        %v701 = vmul.f32 %v672, 100.0
        %v702 = vmul.f32 %v675, 100.0
        %v703 = vmul.f32 %v678, 100.0
        %v704 = vmul.f32 %v681, 100.0
        %v705 = vmul.f32 %v684, 100.0
        %v706 = vmul.f32 %v687, 100.0
        %v707 = vmul.f32 %v690, 100.0
        %v708 = vmin.f32 %v692, 20.0
        %v709 = vmin.f32 %v693, 20.0
        %v710 = vmin.f32 %v694, 20.0
        %v711 = vmin.f32 %v695, 20.0
        %v712 = vmin.f32 %v696, 20.0
        %v713 = vmin.f32 %v697, 20.0
        %v714 = vmin.f32 %v698, 20.0
        %v715 = vmin.f32 %v699, 20.0
        %v716 = vmin.f32 %v700, 20.0
        %v717 = vmin.f32 %v701, 20.0
        %v718 = vmin.f32 %v702, 20.0
        %v719 = vmin.f32 %v703, 20.0
        %v720 = vmin.f32 %v704, 20.0
        %v721 = vmin.f32 %v705, 20.0
        %v722 = vmin.f32 %v706, 20.0
        %v723 = vmin.f32 %v707, 20.0
        %v724 = vmul.f32 %v708, 1.442695
        %v725 = vpow.pop %v724
        %v726 = vmul.f32 %v709, 1.442695
        %v727 = vpow.pop %v726
        %v728 = vmul.f32 %v710, 1.442695
        %v729 = vpow.pop %v728
        %v730 = vmul.f32 %v711, 1.442695
        %v731 = vpow.pop %v730
        %v732 = vmul.f32 %v712, 1.442695
        %v733 = vpow.pop %v732
        %v734 = vmul.f32 %v713, 1.442695
        %v735 = vpow.pop %v734
        %v736 = vmul.f32 %v714, 1.442695
        %v737 = vpow.pop %v736
        %v738 = vmul.f32 %v715, 1.442695
        %v739 = vpow.pop %v738
        %v740 = vmul.f32 %v716, 1.442695
        %v741 = vpow.pop %v740
        %v742 = vmul.f32 %v717, 1.442695
        %v743 = vpow.pop %v742
        %v744 = vmul.f32 %v718, 1.442695
        %v745 = vpow.pop %v744
        %v746 = vmul.f32 %v719, 1.442695
        %v747 = vpow.pop %v746
        %v748 = vmul.f32 %v720, 1.442695
        %v749 = vpow.pop %v748
        %v750 = vmul.f32 %v721, 1.442695
        %v751 = vpow.pop %v750
        %v752 = vmul.f32 %v722, 1.442695
        %v753 = vpow.pop %v752
        %v754 = vmul.f32 %v723, 1.442695
        %v755 = vpow.pop %v754
        %v756 = vadd.f32 %v725, 1.0
        %v757 = vlog2.pop %v756
        %v758 = vmul.f32 %v757, 0.6931472
        %v759 = vmul.f32 -0.5, %v725
        %v760 = vadd.f32 %v759, 1.0
        %v761 = vmul.f32 %v760, %v725
        %v762 = vand.u32 2147483647, %v725
        %vm763 = vcmp.lt.f32.partialorder %v762, 0.0004427343
        %v764 = vsel %vm763, %v761, %v758
        %v765 = vadd.f32 %v727, 1.0
        %v766 = vlog2.pop %v765
        %v767 = vmul.f32 %v766, 0.6931472
        %v768 = vmul.f32 -0.5, %v727
        %v769 = vadd.f32 %v768, 1.0
        %v770 = vmul.f32 %v769, %v727
        %v771 = vand.u32 2147483647, %v727
        %vm772 = vcmp.lt.f32.partialorder %v771, 0.0004427343
        %v773 = vsel %vm772, %v770, %v767
        %v774 = vadd.f32 %v729, 1.0
        %v775 = vlog2.pop %v774
        %v776 = vmul.f32 %v775, 0.6931472
        %v777 = vmul.f32 -0.5, %v729
        %v778 = vadd.f32 %v777, 1.0
        %v779 = vmul.f32 %v778, %v729
        %v780 = vand.u32 2147483647, %v729
        %vm781 = vcmp.lt.f32.partialorder %v780, 0.0004427343
        %v782 = vsel %vm781, %v779, %v776
        %v783 = vadd.f32 %v731, 1.0
        %v784 = vlog2.pop %v783
        %v785 = vmul.f32 %v784, 0.6931472
        %v786 = vmul.f32 -0.5, %v731
        %v787 = vadd.f32 %v786, 1.0
        %v788 = vmul.f32 %v787, %v731
        %v789 = vand.u32 2147483647, %v731
        %vm790 = vcmp.lt.f32.partialorder %v789, 0.0004427343
        %v791 = vsel %vm790, %v788, %v785
        %v792 = vadd.f32 %v733, 1.0
        %v793 = vlog2.pop %v792
        %v794 = vmul.f32 %v793, 0.6931472
        %v795 = vmul.f32 -0.5, %v733
        %v796 = vadd.f32 %v795, 1.0
        %v797 = vmul.f32 %v796, %v733
        %v798 = vand.u32 2147483647, %v733
        %vm799 = vcmp.lt.f32.partialorder %v798, 0.0004427343
        %v800 = vsel %vm799, %v797, %v794
        %v801 = vadd.f32 %v735, 1.0
        %v802 = vlog2.pop %v801
        %v803 = vmul.f32 %v802, 0.6931472
        %v804 = vmul.f32 -0.5, %v735
        %v805 = vadd.f32 %v804, 1.0
        %v806 = vmul.f32 %v805, %v735
        %v807 = vand.u32 2147483647, %v735
        %vm808 = vcmp.lt.f32.partialorder %v807, 0.0004427343
        %v809 = vsel %vm808, %v806, %v803
        %v810 = vadd.f32 %v737, 1.0
        %v811 = vlog2.pop %v810
        %v812 = vmul.f32 %v811, 0.6931472
        %v813 = vmul.f32 -0.5, %v737
        %v814 = vadd.f32 %v813, 1.0
        %v815 = vmul.f32 %v814, %v737
        %v816 = vand.u32 2147483647, %v737
        %vm817 = vcmp.lt.f32.partialorder %v816, 0.0004427343
        %v818 = vsel %vm817, %v815, %v812
        %v819 = vadd.f32 %v739, 1.0
        %v820 = vlog2.pop %v819
        %v821 = vmul.f32 %v820, 0.6931472
        %v822 = vmul.f32 -0.5, %v739
        %v823 = vadd.f32 %v822, 1.0
        %v824 = vmul.f32 %v823, %v739
        %v825 = vand.u32 2147483647, %v739
        %vm826 = vcmp.lt.f32.partialorder %v825, 0.0004427343
        %v827 = vsel %vm826, %v824, %v821
        %v828 = vadd.f32 %v741, 1.0
        %v829 = vlog2.pop %v828
        %v830 = vmul.f32 %v829, 0.6931472
        %v831 = vmul.f32 -0.5, %v741
        %v832 = vadd.f32 %v831, 1.0
        %v833 = vmul.f32 %v832, %v741
        %v834 = vand.u32 2147483647, %v741
        %vm835 = vcmp.lt.f32.partialorder %v834, 0.0004427343
        %v836 = vsel %vm835, %v833, %v830
        %v837 = vadd.f32 %v743, 1.0
        %v838 = vlog2.pop %v837
        %v839 = vmul.f32 %v838, 0.6931472
        %v840 = vmul.f32 -0.5, %v743
        %v841 = vadd.f32 %v840, 1.0
        %v842 = vmul.f32 %v841, %v743
        %v843 = vand.u32 2147483647, %v743
        %vm844 = vcmp.lt.f32.partialorder %v843, 0.0004427343
        %v845 = vsel %vm844, %v842, %v839
        %v846 = vadd.f32 %v745, 1.0
        %v847 = vlog2.pop %v846
        %v848 = vmul.f32 %v847, 0.6931472
        %v849 = vmul.f32 -0.5, %v745
        %v850 = vadd.f32 %v849, 1.0
        %v851 = vmul.f32 %v850, %v745
        %v852 = vand.u32 2147483647, %v745
        %vm853 = vcmp.lt.f32.partialorder %v852, 0.0004427343
        %v854 = vsel %vm853, %v851, %v848
        %v855 = vadd.f32 %v747, 1.0
        %v856 = vlog2.pop %v855
        %v857 = vmul.f32 %v856, 0.6931472
        %v858 = vmul.f32 -0.5, %v747
        %v859 = vadd.f32 %v858, 1.0
        %v860 = vmul.f32 %v859, %v747
        %v861 = vand.u32 2147483647, %v747
        %vm862 = vcmp.lt.f32.partialorder %v861, 0.0004427343
        %v863 = vsel %vm862, %v860, %v857
        %v864 = vadd.f32 %v749, 1.0
        %v865 = vlog2.pop %v864
        %v866 = vmul.f32 %v865, 0.6931472
        %v867 = vmul.f32 -0.5, %v749
        %v868 = vadd.f32 %v867, 1.0
        %v869 = vmul.f32 %v868, %v749
        %v870 = vand.u32 2147483647, %v749
        %vm871 = vcmp.lt.f32.partialorder %v870, 0.0004427343
        %v872 = vsel %vm871, %v869, %v866
        %v873 = vadd.f32 %v751, 1.0
        %v874 = vlog2.pop %v873
        %v875 = vmul.f32 %v874, 0.6931472
        %v876 = vmul.f32 -0.5, %v751
        %v877 = vadd.f32 %v876, 1.0
        %v878 = vmul.f32 %v877, %v751
        %v879 = vand.u32 2147483647, %v751
        %vm880 = vcmp.lt.f32.partialorder %v879, 0.0004427343
        %v881 = vsel %vm880, %v878, %v875
        %v882 = vadd.f32 %v753, 1.0
        %v883 = vlog2.pop %v882
        %v884 = vmul.f32 %v883, 0.6931472
        %v885 = vmul.f32 -0.5, %v753
        %v886 = vadd.f32 %v885, 1.0
        %v887 = vmul.f32 %v886, %v753
        %v888 = vand.u32 2147483647, %v753
        %vm889 = vcmp.lt.f32.partialorder %v888, 0.0004427343
        %v890 = vsel %vm889, %v887, %v884
        %v891 = vadd.f32 %v755, 1.0
        %v892 = vlog2.pop %v891
        %v893 = vmul.f32 %v892, 0.6931472
        %v894 = vmul.f32 -0.5, %v755
        %v895 = vadd.f32 %v894, 1.0
        %v896 = vmul.f32 %v895, %v755
        %v897 = vand.u32 2147483647, %v755
        %vm898 = vcmp.lt.f32.partialorder %v897, 0.0004427343
        %v899 = vsel %vm898, %v896, %v893
        %v900 = vmul.f32 %v764, 0.01
        %v901 = vmul.f32 %v773, 0.01
        %v902 = vmul.f32 %v782, 0.01
        %v903 = vmul.f32 %v791, 0.01
        %v904 = vmul.f32 %v800, 0.01
        %v905 = vmul.f32 %v809, 0.01
        %v906 = vmul.f32 %v818, 0.01
        %v907 = vmul.f32 %v827, 0.01
        %v908 = vmul.f32 %v836, 0.01
        %v909 = vmul.f32 %v845, 0.01
        %v910 = vmul.f32 %v854, 0.01
        %v911 = vmul.f32 %v863, 0.01
        %v912 = vmul.f32 %v872, 0.01
        %v913 = vmul.f32 %v881, 0.01
        %v914 = vmul.f32 %v890, 0.01
        %v915 = vmul.f32 %v899, 0.01
        %vm916 = vcmp.gt.f32.partialorder %v692, 20.0
        %vm917 = vcmp.gt.f32.partialorder %v693, 20.0
        %vm918 = vcmp.gt.f32.partialorder %v694, 20.0
        %vm919 = vcmp.gt.f32.partialorder %v695, 20.0
        %vm920 = vcmp.gt.f32.partialorder %v696, 20.0
        %vm921 = vcmp.gt.f32.partialorder %v697, 20.0
        %vm922 = vcmp.gt.f32.partialorder %v698, 20.0
        %vm923 = vcmp.gt.f32.partialorder %v699, 20.0
        %vm924 = vcmp.gt.f32.partialorder %v700, 20.0
        %vm925 = vcmp.gt.f32.partialorder %v701, 20.0
        %vm926 = vcmp.gt.f32.partialorder %v702, 20.0
        %vm927 = vcmp.gt.f32.partialorder %v703, 20.0
        %vm928 = vcmp.gt.f32.partialorder %v704, 20.0
        %vm929 = vcmp.gt.f32.partialorder %v705, 20.0
        %vm930 = vcmp.gt.f32.partialorder %v706, 20.0
        %vm931 = vcmp.gt.f32.partialorder %v707, 20.0
        %v932 = vsel %vm916, %v645, %v900
        %v933 = vsel %vm917, %v648, %v901
        %v934 = vsel %vm918, %v651, %v902
        %v935 = vsel %vm919, %v654, %v903
        %v936 = vsel %vm920, %v657, %v904
        %v937 = vsel %vm921, %v660, %v905
        %v938 = vsel %vm922, %v663, %v906
        %v939 = vsel %vm923, %v666, %v907
        %v940 = vsel %vm924, %v669, %v908
        %v941 = vsel %vm925, %v672, %v909
        %v942 = vsel %vm926, %v675, %v910
        %v943 = vsel %vm927, %v678, %v911
        %v944 = vsel %vm928, %v681, %v912
        %v945 = vsel %vm929, %v684, %v913
        %v946 = vsel %vm930, %v687, %v914
        %v947 = vsel %vm931, %v690, %v915
        %s948 = scalar_lea.vmem [#allocation2], 128
        %v949 = vld [vmem:[%s948] sm:$0xff]
        %v950 = vld [vmem:[%s948 + $0x8] sm:$0xff]
        %v951 = vld [vmem:[%s948 + $0x10] sm:$0xff]
        %v952 = vld [vmem:[%s948 + $0x18] sm:$0xff]
        %v953 = vld [vmem:[%s948 + $0x20] sm:$0xff]
        %v954 = vld [vmem:[%s948 + $0x28] sm:$0xff]
        %v955 = vld [vmem:[%s948 + $0x30] sm:$0xff]
        %v956 = vld [vmem:[%s948 + $0x38] sm:$0xff]
        %v957 = vld [vmem:[%s948 + $0x40] sm:$0xff]
        %v958 = vld [vmem:[%s948 + $0x48] sm:$0xff]
        %v959 = vld [vmem:[%s948 + $0x50] sm:$0xff]
        %v960 = vld [vmem:[%s948 + $0x58] sm:$0xff]
        %v961 = vld [vmem:[%s948 + $0x60] sm:$0xff]
        %v962 = vld [vmem:[%s948 + $0x68] sm:$0xff]
        %v963 = vld [vmem:[%s948 + $0x70] sm:$0xff]
        %v964 = vld [vmem:[%s948 + $0x78] sm:$0xff]
        %s965 = scalar_lea.vmem %s1, 16
        %v966 = vld [vmem:[%s965] sm:$0xff]
        %v967 = vld [vmem:[%s965 + $0x8] sm:$0xf]
        %v969 = vsel %vm285, %v967, 0
        %971 = vmatpush.msra.mxu0 0.0
        %972 = vmatpush.msra.mxu0 0.0
        %973 = vmatpush.msra.mxu0 0.0
        %974 = vmatpush.msra.mxu0 0.0
        %975 = vmatpush.msra.mxu0 0.0
        %976 = vmatpush.msra.mxu0 0.0
        %977 = vmatpush.msra.mxu0 0.0
        %978 = vmatpush.msra.mxu0 0.0
        %979 = vmatpush.msra.mxu0 0.0
        %980 = vmatpush.msra.mxu0 0.0
        %981 = vmatpush.msra.mxu0 0.0
        %982 = vmatpush.msra.mxu0 0.0
        %983 = vmatpush.msra.mxu0 0.0
        %984 = vmatpush.msra.mxu0 0.0
        %985 = vmatpush.msra.mxu0 %v969
        %986 = vmatpush.msra.mxu0 %v966
        %987 = vmatmul.f32.gmra.mxu0 %v238
        %v988 = vpop.f32.mrf.mxu0
        %v989 = vadd.f32 0.0, %v988
        %990 = vmatmul.f32.gmra.mxu0 %v241
        %v991 = vpop.f32.mrf.mxu0
        %v992 = vadd.f32 0.0, %v991
        %993 = vmatmul.f32.gmra.mxu0 %v244
        %v994 = vpop.f32.mrf.mxu0
        %v995 = vadd.f32 0.0, %v994
        %996 = vmatmul.f32.gmra.mxu0 %v247
        %v997 = vpop.f32.mrf.mxu0
        %v998 = vadd.f32 0.0, %v997
        %999 = vmatmul.f32.gmra.mxu0 %v250
        %v1000 = vpop.f32.mrf.mxu0
        %v1001 = vadd.f32 0.0, %v1000
        %1002 = vmatmul.f32.gmra.mxu0 %v253
        %v1003 = vpop.f32.mrf.mxu0
        %v1004 = vadd.f32 0.0, %v1003
        %1005 = vmatmul.f32.gmra.mxu0 %v256
        %v1006 = vpop.f32.mrf.mxu0
        %v1007 = vadd.f32 0.0, %v1006
        %1008 = vmatmul.f32.gmra.mxu0 %v259
        %v1009 = vpop.f32.mrf.mxu0
        %v1010 = vadd.f32 0.0, %v1009
        %1011 = vmatmul.f32.gmra.mxu0 %v262
        %v1012 = vpop.f32.mrf.mxu0
        %v1013 = vadd.f32 0.0, %v1012
        %1014 = vmatmul.f32.gmra.mxu0 %v265
        %v1015 = vpop.f32.mrf.mxu0
        %v1016 = vadd.f32 0.0, %v1015
        %1017 = vmatmul.f32.gmra.mxu0 %v268
        %v1018 = vpop.f32.mrf.mxu0
        %v1019 = vadd.f32 0.0, %v1018
        %1020 = vmatmul.f32.gmra.mxu0 %v271
        %v1021 = vpop.f32.mrf.mxu0
        %v1022 = vadd.f32 0.0, %v1021
        %1023 = vmatmul.f32.gmra.mxu0 %v274
        %v1024 = vpop.f32.mrf.mxu0
        %v1025 = vadd.f32 0.0, %v1024
        %1026 = vmatmul.f32.gmra.mxu0 %v277
        %v1027 = vpop.f32.mrf.mxu0
        %v1028 = vadd.f32 0.0, %v1027
        %1029 = vmatmul.f32.gmra.mxu0 %v280
        %v1030 = vpop.f32.mrf.mxu0
        %v1031 = vadd.f32 0.0, %v1030
        %1032 = vmatmul.f32.gmra.mxu0 %v283
        %v1033 = vpop.f32.mrf.mxu0
        %v1034 = vadd.f32 0.0, %v1033
        %1035 = vdwg.mxu0
        %1036 = vmatpush.msra.mxu0 %v964
        %1037 = vmatpush.msra.mxu0 %v963
        %1038 = vmatpush.msra.mxu0 %v962
        %1039 = vmatpush.msra.mxu0 %v961
        %1040 = vmatpush.msra.mxu0 %v960
        %1041 = vmatpush.msra.mxu0 %v959
        %1042 = vmatpush.msra.mxu0 %v958
        %1043 = vmatpush.msra.mxu0 %v957
        %1044 = vmatpush.msra.mxu0 %v956
        %1045 = vmatpush.msra.mxu0 %v955
        %1046 = vmatpush.msra.mxu0 %v954
        %1047 = vmatpush.msra.mxu0 %v953
        %1048 = vmatpush.msra.mxu0 %v952
        %1049 = vmatpush.msra.mxu0 %v951
        %1050 = vmatpush.msra.mxu0 %v950
        %1051 = vmatpush.msra.mxu0 %v949
        %1052 = vmatmul.f32.gmra.mxu0 %v932
        %v1053 = vpop.f32.mrf.mxu0
        %v1054 = vadd.f32 %v989, %v1053
        %1055 = vmatmul.f32.gmra.mxu0 %v933
        %v1056 = vpop.f32.mrf.mxu0
        %v1057 = vadd.f32 %v992, %v1056
        %1058 = vmatmul.f32.gmra.mxu0 %v934
        %v1059 = vpop.f32.mrf.mxu0
        %v1060 = vadd.f32 %v995, %v1059
        %1061 = vmatmul.f32.gmra.mxu0 %v935
        %v1062 = vpop.f32.mrf.mxu0
        %v1063 = vadd.f32 %v998, %v1062
        %1064 = vmatmul.f32.gmra.mxu0 %v936
        %v1065 = vpop.f32.mrf.mxu0
        %v1066 = vadd.f32 %v1001, %v1065
        %1067 = vmatmul.f32.gmra.mxu0 %v937
        %v1068 = vpop.f32.mrf.mxu0
        %v1069 = vadd.f32 %v1004, %v1068
        %1070 = vmatmul.f32.gmra.mxu0 %v938
        %v1071 = vpop.f32.mrf.mxu0
        %v1072 = vadd.f32 %v1007, %v1071
        %1073 = vmatmul.f32.gmra.mxu0 %v939
        %v1074 = vpop.f32.mrf.mxu0
        %v1075 = vadd.f32 %v1010, %v1074
        %1076 = vmatmul.f32.gmra.mxu0 %v940
        %v1077 = vpop.f32.mrf.mxu0
        %v1078 = vadd.f32 %v1013, %v1077
        %1079 = vmatmul.f32.gmra.mxu0 %v941
        %v1080 = vpop.f32.mrf.mxu0
        %v1081 = vadd.f32 %v1016, %v1080
        %1082 = vmatmul.f32.gmra.mxu0 %v942
        %v1083 = vpop.f32.mrf.mxu0
        %v1084 = vadd.f32 %v1019, %v1083
        %1085 = vmatmul.f32.gmra.mxu0 %v943
        %v1086 = vpop.f32.mrf.mxu0
        %v1087 = vadd.f32 %v1022, %v1086
        %1088 = vmatmul.f32.gmra.mxu0 %v944
        %v1089 = vpop.f32.mrf.mxu0
        %v1090 = vadd.f32 %v1025, %v1089
        %1091 = vmatmul.f32.gmra.mxu0 %v945
        %v1092 = vpop.f32.mrf.mxu0
        %v1093 = vadd.f32 %v1028, %v1092
        %1094 = vmatmul.f32.gmra.mxu0 %v946
        %v1095 = vpop.f32.mrf.mxu0
        %v1096 = vadd.f32 %v1031, %v1095
        %1097 = vmatmul.f32.gmra.mxu0 %v947
        %v1098 = vpop.f32.mrf.mxu0
        %v1099 = vadd.f32 %v1034, %v1098
        %1100 = vdwg.mxu0
        %v1101 = vperm.slane %v232, 2
        %v1102 = vadd.f32 %v1054, %v1101
        %v1103 = vadd.f32 %v1057, %v1101
        %v1104 = vadd.f32 %v1060, %v1101
        %v1105 = vadd.f32 %v1063, %v1101
        %v1106 = vadd.f32 %v1066, %v1101
        %v1107 = vadd.f32 %v1069, %v1101
        %v1108 = vadd.f32 %v1072, %v1101
        %v1109 = vadd.f32 %v1075, %v1101
        %v1110 = vadd.f32 %v1078, %v1101
        %v1111 = vadd.f32 %v1081, %v1101
        %v1112 = vadd.f32 %v1084, %v1101
        %v1113 = vadd.f32 %v1087, %v1101
        %v1114 = vadd.f32 %v1090, %v1101
        %v1115 = vadd.f32 %v1093, %v1101
        %v1116 = vadd.f32 %v1096, %v1101
        %v1117 = vadd.f32 %v1099, %v1101
        %v1118 = vmul.f32 %v1102, 100.0
        %v1119 = vmul.f32 %v1103, 100.0
        %v1120 = vmul.f32 %v1104, 100.0
        %v1121 = vmul.f32 %v1105, 100.0
        %v1122 = vmul.f32 %v1106, 100.0
        %v1123 = vmul.f32 %v1107, 100.0
        %v1124 = vmul.f32 %v1108, 100.0
        %v1125 = vmul.f32 %v1109, 100.0
        %v1126 = vmul.f32 %v1110, 100.0
        %v1127 = vmul.f32 %v1111, 100.0
        %v1128 = vmul.f32 %v1112, 100.0
        %v1129 = vmul.f32 %v1113, 100.0
        %v1130 = vmul.f32 %v1114, 100.0
        %v1131 = vmul.f32 %v1115, 100.0
        %v1132 = vmul.f32 %v1116, 100.0
        %v1133 = vmul.f32 %v1117, 100.0
        %v1134 = vmin.f32 %v1118, 20.0
        %v1135 = vmin.f32 %v1119, 20.0
        %v1136 = vmin.f32 %v1120, 20.0
        %v1137 = vmin.f32 %v1121, 20.0
        %v1138 = vmin.f32 %v1122, 20.0
        %v1139 = vmin.f32 %v1123, 20.0
        %v1140 = vmin.f32 %v1124, 20.0
        %v1141 = vmin.f32 %v1125, 20.0
        %v1142 = vmin.f32 %v1126, 20.0
        %v1143 = vmin.f32 %v1127, 20.0
        %v1144 = vmin.f32 %v1128, 20.0
        %v1145 = vmin.f32 %v1129, 20.0
        %v1146 = vmin.f32 %v1130, 20.0
        %v1147 = vmin.f32 %v1131, 20.0
        %v1148 = vmin.f32 %v1132, 20.0
        %v1149 = vmin.f32 %v1133, 20.0
        %v1150 = vmul.f32 %v1134, 1.442695
        %v1151 = vpow.pop %v1150
        %v1152 = vmul.f32 %v1135, 1.442695
        %v1153 = vpow.pop %v1152
        %v1154 = vmul.f32 %v1136, 1.442695
        %v1155 = vpow.pop %v1154
        %v1156 = vmul.f32 %v1137, 1.442695
        %v1157 = vpow.pop %v1156
        %v1158 = vmul.f32 %v1138, 1.442695
        %v1159 = vpow.pop %v1158
        %v1160 = vmul.f32 %v1139, 1.442695
        %v1161 = vpow.pop %v1160
        %v1162 = vmul.f32 %v1140, 1.442695
        %v1163 = vpow.pop %v1162
        %v1164 = vmul.f32 %v1141, 1.442695
        %v1165 = vpow.pop %v1164
        %v1166 = vmul.f32 %v1142, 1.442695
        %v1167 = vpow.pop %v1166
        %v1168 = vmul.f32 %v1143, 1.442695
        %v1169 = vpow.pop %v1168
        %v1170 = vmul.f32 %v1144, 1.442695
        %v1171 = vpow.pop %v1170
        %v1172 = vmul.f32 %v1145, 1.442695
        %v1173 = vpow.pop %v1172
        %v1174 = vmul.f32 %v1146, 1.442695
        %v1175 = vpow.pop %v1174
        %v1176 = vmul.f32 %v1147, 1.442695
        %v1177 = vpow.pop %v1176
        %v1178 = vmul.f32 %v1148, 1.442695
        %v1179 = vpow.pop %v1178
        %v1180 = vmul.f32 %v1149, 1.442695
        %v1181 = vpow.pop %v1180
        %v1182 = vadd.f32 %v1151, 1.0
        %v1183 = vlog2.pop %v1182
        %v1184 = vmul.f32 %v1183, 0.6931472
        %v1185 = vmul.f32 -0.5, %v1151
        %v1186 = vadd.f32 %v1185, 1.0
        %v1187 = vmul.f32 %v1186, %v1151
        %v1188 = vand.u32 2147483647, %v1151
        %vm1189 = vcmp.lt.f32.partialorder %v1188, 0.0004427343
        %v1190 = vsel %vm1189, %v1187, %v1184
        %v1191 = vadd.f32 %v1153, 1.0
        %v1192 = vlog2.pop %v1191
        %v1193 = vmul.f32 %v1192, 0.6931472
        %v1194 = vmul.f32 -0.5, %v1153
        %v1195 = vadd.f32 %v1194, 1.0
        %v1196 = vmul.f32 %v1195, %v1153
        %v1197 = vand.u32 2147483647, %v1153
        %vm1198 = vcmp.lt.f32.partialorder %v1197, 0.0004427343
        %v1199 = vsel %vm1198, %v1196, %v1193
        %v1200 = vadd.f32 %v1155, 1.0
        %v1201 = vlog2.pop %v1200
        %v1202 = vmul.f32 %v1201, 0.6931472
        %v1203 = vmul.f32 -0.5, %v1155
        %v1204 = vadd.f32 %v1203, 1.0
        %v1205 = vmul.f32 %v1204, %v1155
        %v1206 = vand.u32 2147483647, %v1155
        %vm1207 = vcmp.lt.f32.partialorder %v1206, 0.0004427343
        %v1208 = vsel %vm1207, %v1205, %v1202
        %v1209 = vadd.f32 %v1157, 1.0
        %v1210 = vlog2.pop %v1209
        %v1211 = vmul.f32 %v1210, 0.6931472
        %v1212 = vmul.f32 -0.5, %v1157
        %v1213 = vadd.f32 %v1212, 1.0
        %v1214 = vmul.f32 %v1213, %v1157
        %v1215 = vand.u32 2147483647, %v1157
        %vm1216 = vcmp.lt.f32.partialorder %v1215, 0.0004427343
        %v1217 = vsel %vm1216, %v1214, %v1211
        %v1218 = vadd.f32 %v1159, 1.0
        %v1219 = vlog2.pop %v1218
        %v1220 = vmul.f32 %v1219, 0.6931472
        %v1221 = vmul.f32 -0.5, %v1159
        %v1222 = vadd.f32 %v1221, 1.0
        %v1223 = vmul.f32 %v1222, %v1159
        %v1224 = vand.u32 2147483647, %v1159
        %vm1225 = vcmp.lt.f32.partialorder %v1224, 0.0004427343
        %v1226 = vsel %vm1225, %v1223, %v1220
        %v1227 = vadd.f32 %v1161, 1.0
        %v1228 = vlog2.pop %v1227
        %v1229 = vmul.f32 %v1228, 0.6931472
        %v1230 = vmul.f32 -0.5, %v1161
        %v1231 = vadd.f32 %v1230, 1.0
        %v1232 = vmul.f32 %v1231, %v1161
        %v1233 = vand.u32 2147483647, %v1161
        %vm1234 = vcmp.lt.f32.partialorder %v1233, 0.0004427343
        %v1235 = vsel %vm1234, %v1232, %v1229
        %v1236 = vadd.f32 %v1163, 1.0
        %v1237 = vlog2.pop %v1236
        %v1238 = vmul.f32 %v1237, 0.6931472
        %v1239 = vmul.f32 -0.5, %v1163
        %v1240 = vadd.f32 %v1239, 1.0
        %v1241 = vmul.f32 %v1240, %v1163
        %v1242 = vand.u32 2147483647, %v1163
        %vm1243 = vcmp.lt.f32.partialorder %v1242, 0.0004427343
        %v1244 = vsel %vm1243, %v1241, %v1238
        %v1245 = vadd.f32 %v1165, 1.0
        %v1246 = vlog2.pop %v1245
        %v1247 = vmul.f32 %v1246, 0.6931472
        %v1248 = vmul.f32 -0.5, %v1165
        %v1249 = vadd.f32 %v1248, 1.0
        %v1250 = vmul.f32 %v1249, %v1165
        %v1251 = vand.u32 2147483647, %v1165
        %vm1252 = vcmp.lt.f32.partialorder %v1251, 0.0004427343
        %v1253 = vsel %vm1252, %v1250, %v1247
        %v1254 = vadd.f32 %v1167, 1.0
        %v1255 = vlog2.pop %v1254
        %v1256 = vmul.f32 %v1255, 0.6931472
        %v1257 = vmul.f32 -0.5, %v1167
        %v1258 = vadd.f32 %v1257, 1.0
        %v1259 = vmul.f32 %v1258, %v1167
        %v1260 = vand.u32 2147483647, %v1167
        %vm1261 = vcmp.lt.f32.partialorder %v1260, 0.0004427343
        %v1262 = vsel %vm1261, %v1259, %v1256
        %v1263 = vadd.f32 %v1169, 1.0
        %v1264 = vlog2.pop %v1263
        %v1265 = vmul.f32 %v1264, 0.6931472
        %v1266 = vmul.f32 -0.5, %v1169
        %v1267 = vadd.f32 %v1266, 1.0
        %v1268 = vmul.f32 %v1267, %v1169
        %v1269 = vand.u32 2147483647, %v1169
        %vm1270 = vcmp.lt.f32.partialorder %v1269, 0.0004427343
        %v1271 = vsel %vm1270, %v1268, %v1265
        %v1272 = vadd.f32 %v1171, 1.0
        %v1273 = vlog2.pop %v1272
        %v1274 = vmul.f32 %v1273, 0.6931472
        %v1275 = vmul.f32 -0.5, %v1171
        %v1276 = vadd.f32 %v1275, 1.0
        %v1277 = vmul.f32 %v1276, %v1171
        %v1278 = vand.u32 2147483647, %v1171
        %vm1279 = vcmp.lt.f32.partialorder %v1278, 0.0004427343
        %v1280 = vsel %vm1279, %v1277, %v1274
        %v1281 = vadd.f32 %v1173, 1.0
        %v1282 = vlog2.pop %v1281
        %v1283 = vmul.f32 %v1282, 0.6931472
        %v1284 = vmul.f32 -0.5, %v1173
        %v1285 = vadd.f32 %v1284, 1.0
        %v1286 = vmul.f32 %v1285, %v1173
        %v1287 = vand.u32 2147483647, %v1173
        %vm1288 = vcmp.lt.f32.partialorder %v1287, 0.0004427343
        %v1289 = vsel %vm1288, %v1286, %v1283
        %v1290 = vadd.f32 %v1175, 1.0
        %v1291 = vlog2.pop %v1290
        %v1292 = vmul.f32 %v1291, 0.6931472
        %v1293 = vmul.f32 -0.5, %v1175
        %v1294 = vadd.f32 %v1293, 1.0
        %v1295 = vmul.f32 %v1294, %v1175
        %v1296 = vand.u32 2147483647, %v1175
        %vm1297 = vcmp.lt.f32.partialorder %v1296, 0.0004427343
        %v1298 = vsel %vm1297, %v1295, %v1292
        %v1299 = vadd.f32 %v1177, 1.0
        %v1300 = vlog2.pop %v1299
        %v1301 = vmul.f32 %v1300, 0.6931472
        %v1302 = vmul.f32 -0.5, %v1177
        %v1303 = vadd.f32 %v1302, 1.0
        %v1304 = vmul.f32 %v1303, %v1177
        %v1305 = vand.u32 2147483647, %v1177
        %vm1306 = vcmp.lt.f32.partialorder %v1305, 0.0004427343
        %v1307 = vsel %vm1306, %v1304, %v1301
        %v1308 = vadd.f32 %v1179, 1.0
        %v1309 = vlog2.pop %v1308
        %v1310 = vmul.f32 %v1309, 0.6931472
        %v1311 = vmul.f32 -0.5, %v1179
        %v1312 = vadd.f32 %v1311, 1.0
        %v1313 = vmul.f32 %v1312, %v1179
        %v1314 = vand.u32 2147483647, %v1179
        %vm1315 = vcmp.lt.f32.partialorder %v1314, 0.0004427343
        %v1316 = vsel %vm1315, %v1313, %v1310
        %v1317 = vadd.f32 %v1181, 1.0
        %v1318 = vlog2.pop %v1317
        %v1319 = vmul.f32 %v1318, 0.6931472
        %v1320 = vmul.f32 -0.5, %v1181
        %v1321 = vadd.f32 %v1320, 1.0
        %v1322 = vmul.f32 %v1321, %v1181
        %v1323 = vand.u32 2147483647, %v1181
        %vm1324 = vcmp.lt.f32.partialorder %v1323, 0.0004427343
        %v1325 = vsel %vm1324, %v1322, %v1319
        %v1326 = vmul.f32 %v1190, 0.01
        %v1327 = vmul.f32 %v1199, 0.01
        %v1328 = vmul.f32 %v1208, 0.01
        %v1329 = vmul.f32 %v1217, 0.01
        %v1330 = vmul.f32 %v1226, 0.01
        %v1331 = vmul.f32 %v1235, 0.01
        %v1332 = vmul.f32 %v1244, 0.01
        %v1333 = vmul.f32 %v1253, 0.01
        %v1334 = vmul.f32 %v1262, 0.01
        %v1335 = vmul.f32 %v1271, 0.01
        %v1336 = vmul.f32 %v1280, 0.01
        %v1337 = vmul.f32 %v1289, 0.01
        %v1338 = vmul.f32 %v1298, 0.01
        %v1339 = vmul.f32 %v1307, 0.01
        %v1340 = vmul.f32 %v1316, 0.01
        %v1341 = vmul.f32 %v1325, 0.01
        %vm1342 = vcmp.gt.f32.partialorder %v1118, 20.0
        %vm1343 = vcmp.gt.f32.partialorder %v1119, 20.0
        %vm1344 = vcmp.gt.f32.partialorder %v1120, 20.0
        %vm1345 = vcmp.gt.f32.partialorder %v1121, 20.0
        %vm1346 = vcmp.gt.f32.partialorder %v1122, 20.0
        %vm1347 = vcmp.gt.f32.partialorder %v1123, 20.0
        %vm1348 = vcmp.gt.f32.partialorder %v1124, 20.0
        %vm1349 = vcmp.gt.f32.partialorder %v1125, 20.0
        %vm1350 = vcmp.gt.f32.partialorder %v1126, 20.0
        %vm1351 = vcmp.gt.f32.partialorder %v1127, 20.0
        %vm1352 = vcmp.gt.f32.partialorder %v1128, 20.0
        %vm1353 = vcmp.gt.f32.partialorder %v1129, 20.0
        %vm1354 = vcmp.gt.f32.partialorder %v1130, 20.0
        %vm1355 = vcmp.gt.f32.partialorder %v1131, 20.0
        %vm1356 = vcmp.gt.f32.partialorder %v1132, 20.0
        %vm1357 = vcmp.gt.f32.partialorder %v1133, 20.0
        %v1358 = vsel %vm1342, %v1102, %v1326
        %v1359 = vsel %vm1343, %v1103, %v1327
        %v1360 = vsel %vm1344, %v1104, %v1328
        %v1361 = vsel %vm1345, %v1105, %v1329
        %v1362 = vsel %vm1346, %v1106, %v1330
        %v1363 = vsel %vm1347, %v1107, %v1331
        %v1364 = vsel %vm1348, %v1108, %v1332
        %v1365 = vsel %vm1349, %v1109, %v1333
        %v1366 = vsel %vm1350, %v1110, %v1334
        %v1367 = vsel %vm1351, %v1111, %v1335
        %v1368 = vsel %vm1352, %v1112, %v1336
        %v1369 = vsel %vm1353, %v1113, %v1337
        %v1370 = vsel %vm1354, %v1114, %v1338
        %v1371 = vsel %vm1355, %v1115, %v1339
        %v1372 = vsel %vm1356, %v1116, %v1340
        %v1373 = vsel %vm1357, %v1117, %v1341
        %s1374 = scalar_lea.vmem [#allocation2], 256
        %v1375 = vld [vmem:[%s1374] sm:$0xff]
        %v1376 = vld [vmem:[%s1374 + $0x8] sm:$0xff]
        %v1377 = vld [vmem:[%s1374 + $0x10] sm:$0xff]
        %v1378 = vld [vmem:[%s1374 + $0x18] sm:$0xff]
        %v1379 = vld [vmem:[%s1374 + $0x20] sm:$0xff]
        %v1380 = vld [vmem:[%s1374 + $0x28] sm:$0xff]
        %v1381 = vld [vmem:[%s1374 + $0x30] sm:$0xff]
        %v1382 = vld [vmem:[%s1374 + $0x38] sm:$0xff]
        %v1383 = vld [vmem:[%s1374 + $0x40] sm:$0xff]
        %v1384 = vld [vmem:[%s1374 + $0x48] sm:$0xff]
        %v1385 = vld [vmem:[%s1374 + $0x50] sm:$0xff]
        %v1386 = vld [vmem:[%s1374 + $0x58] sm:$0xff]
        %v1387 = vld [vmem:[%s1374 + $0x60] sm:$0xff]
        %v1388 = vld [vmem:[%s1374 + $0x68] sm:$0xff]
        %v1389 = vld [vmem:[%s1374 + $0x70] sm:$0xff]
        %v1390 = vld [vmem:[%s1374 + $0x78] sm:$0xff]
        %v1391 = vperm.slane %v232, 3
        %1392 = vmatpush.msra.mxu0 %v1390
        %1393 = vmatpush.msra.mxu0 %v1389
        %1394 = vmatpush.msra.mxu0 %v1388
        %1395 = vmatpush.msra.mxu0 %v1387
        %1396 = vmatpush.msra.mxu0 %v1386
        %1397 = vmatpush.msra.mxu0 %v1385
        %1398 = vmatpush.msra.mxu0 %v1384
        %1399 = vmatpush.msra.mxu0 %v1383
        %1400 = vmatpush.msra.mxu0 %v1382
        %1401 = vmatpush.msra.mxu0 %v1381
        %1402 = vmatpush.msra.mxu0 %v1380
        %1403 = vmatpush.msra.mxu0 %v1379
        %1404 = vmatpush.msra.mxu0 %v1378
        %1405 = vmatpush.msra.mxu0 %v1377
        %1406 = vmatpush.msra.mxu0 %v1376
        %1407 = vmatpush.msra.mxu0 %v1375
        %1408 = vmatmul.f32.gmra.mxu0 %v1358
        %v1409 = vpop.f32.mrf.mxu0
        %v1410 = vadd.f32 %v1391, %v1409
        %1411 = vmatmul.f32.gmra.mxu0 %v1359
        %v1412 = vpop.f32.mrf.mxu0
        %v1413 = vadd.f32 %v1391, %v1412
        %1414 = vmatmul.f32.gmra.mxu0 %v1360
        %v1415 = vpop.f32.mrf.mxu0
        %v1416 = vadd.f32 %v1391, %v1415
        %1417 = vmatmul.f32.gmra.mxu0 %v1361
        %v1418 = vpop.f32.mrf.mxu0
        %v1419 = vadd.f32 %v1391, %v1418
        %1420 = vmatmul.f32.gmra.mxu0 %v1362
        %v1421 = vpop.f32.mrf.mxu0
        %v1422 = vadd.f32 %v1391, %v1421
        %1423 = vmatmul.f32.gmra.mxu0 %v1363
        %v1424 = vpop.f32.mrf.mxu0
        %v1425 = vadd.f32 %v1391, %v1424
        %1426 = vmatmul.f32.gmra.mxu0 %v1364
        %v1427 = vpop.f32.mrf.mxu0
        %v1428 = vadd.f32 %v1391, %v1427
        %1429 = vmatmul.f32.gmra.mxu0 %v1365
        %v1430 = vpop.f32.mrf.mxu0
        %v1431 = vadd.f32 %v1391, %v1430
        %1432 = vmatmul.f32.gmra.mxu0 %v1366
        %v1433 = vpop.f32.mrf.mxu0
        %v1434 = vadd.f32 %v1391, %v1433
        %1435 = vmatmul.f32.gmra.mxu0 %v1367
        %v1436 = vpop.f32.mrf.mxu0
        %v1437 = vadd.f32 %v1391, %v1436
        %1438 = vmatmul.f32.gmra.mxu0 %v1368
        %v1439 = vpop.f32.mrf.mxu0
        %v1440 = vadd.f32 %v1391, %v1439
        %1441 = vmatmul.f32.gmra.mxu0 %v1369
        %v1442 = vpop.f32.mrf.mxu0
        %v1443 = vadd.f32 %v1391, %v1442
        %1444 = vmatmul.f32.gmra.mxu0 %v1370
        %v1445 = vpop.f32.mrf.mxu0
        %v1446 = vadd.f32 %v1391, %v1445
        %1447 = vmatmul.f32.gmra.mxu0 %v1371
        %v1448 = vpop.f32.mrf.mxu0
        %v1449 = vadd.f32 %v1391, %v1448
        %1450 = vmatmul.f32.gmra.mxu0 %v1372
        %v1451 = vpop.f32.mrf.mxu0
        %v1452 = vadd.f32 %v1391, %v1451
        %1453 = vmatmul.f32.gmra.mxu0 %v1373
        %v1454 = vpop.f32.mrf.mxu0
        %v1455 = vadd.f32 %v1391, %v1454
        %1456 = vdwg.mxu0
        %v1457 = vmul.f32 %v1410, 100.0
        %v1458 = vmul.f32 %v1413, 100.0
        %v1459 = vmul.f32 %v1416, 100.0
        %v1460 = vmul.f32 %v1419, 100.0
        %v1461 = vmul.f32 %v1422, 100.0
        %v1462 = vmul.f32 %v1425, 100.0
        %v1463 = vmul.f32 %v1428, 100.0
        %v1464 = vmul.f32 %v1431, 100.0
        %v1465 = vmul.f32 %v1434, 100.0
        %v1466 = vmul.f32 %v1437, 100.0
        %v1467 = vmul.f32 %v1440, 100.0
        %v1468 = vmul.f32 %v1443, 100.0
        %v1469 = vmul.f32 %v1446, 100.0
        %v1470 = vmul.f32 %v1449, 100.0
        %v1471 = vmul.f32 %v1452, 100.0
        %v1472 = vmul.f32 %v1455, 100.0
        %v1473 = vmin.f32 %v1457, 20.0
        %v1474 = vmin.f32 %v1458, 20.0
        %v1475 = vmin.f32 %v1459, 20.0
        %v1476 = vmin.f32 %v1460, 20.0
        %v1477 = vmin.f32 %v1461, 20.0
        %v1478 = vmin.f32 %v1462, 20.0
        %v1479 = vmin.f32 %v1463, 20.0
        %v1480 = vmin.f32 %v1464, 20.0
        %v1481 = vmin.f32 %v1465, 20.0
        %v1482 = vmin.f32 %v1466, 20.0
        %v1483 = vmin.f32 %v1467, 20.0
        %v1484 = vmin.f32 %v1468, 20.0
        %v1485 = vmin.f32 %v1469, 20.0
        %v1486 = vmin.f32 %v1470, 20.0
        %v1487 = vmin.f32 %v1471, 20.0
        %v1488 = vmin.f32 %v1472, 20.0
        %v1489 = vmul.f32 %v1473, 1.442695
        %v1490 = vpow.pop %v1489
        %v1491 = vmul.f32 %v1474, 1.442695
        %v1492 = vpow.pop %v1491
        %v1493 = vmul.f32 %v1475, 1.442695
        %v1494 = vpow.pop %v1493
        %v1495 = vmul.f32 %v1476, 1.442695
        %v1496 = vpow.pop %v1495
        %v1497 = vmul.f32 %v1477, 1.442695
        %v1498 = vpow.pop %v1497
        %v1499 = vmul.f32 %v1478, 1.442695
        %v1500 = vpow.pop %v1499
        %v1501 = vmul.f32 %v1479, 1.442695
        %v1502 = vpow.pop %v1501
        %v1503 = vmul.f32 %v1480, 1.442695
        %v1504 = vpow.pop %v1503
        %v1505 = vmul.f32 %v1481, 1.442695
        %v1506 = vpow.pop %v1505
        %v1507 = vmul.f32 %v1482, 1.442695
        %v1508 = vpow.pop %v1507
        %v1509 = vmul.f32 %v1483, 1.442695
        %v1510 = vpow.pop %v1509
        %v1511 = vmul.f32 %v1484, 1.442695
        %v1512 = vpow.pop %v1511
        %v1513 = vmul.f32 %v1485, 1.442695
        %v1514 = vpow.pop %v1513
        %v1515 = vmul.f32 %v1486, 1.442695
        %v1516 = vpow.pop %v1515
        %v1517 = vmul.f32 %v1487, 1.442695
        %v1518 = vpow.pop %v1517
        %v1519 = vmul.f32 %v1488, 1.442695
        %v1520 = vpow.pop %v1519
        %v1521 = vadd.f32 %v1490, 1.0
        %v1522 = vlog2.pop %v1521
        %v1523 = vmul.f32 %v1522, 0.6931472
        %v1524 = vmul.f32 -0.5, %v1490
        %v1525 = vadd.f32 %v1524, 1.0
        %v1526 = vmul.f32 %v1525, %v1490
        %v1527 = vand.u32 2147483647, %v1490
        %vm1528 = vcmp.lt.f32.partialorder %v1527, 0.0004427343
        %v1529 = vsel %vm1528, %v1526, %v1523
        %v1530 = vadd.f32 %v1492, 1.0
        %v1531 = vlog2.pop %v1530
        %v1532 = vmul.f32 %v1531, 0.6931472
        %v1533 = vmul.f32 -0.5, %v1492
        %v1534 = vadd.f32 %v1533, 1.0
        %v1535 = vmul.f32 %v1534, %v1492
        %v1536 = vand.u32 2147483647, %v1492
        %vm1537 = vcmp.lt.f32.partialorder %v1536, 0.0004427343
        %v1538 = vsel %vm1537, %v1535, %v1532
        %v1539 = vadd.f32 %v1494, 1.0
        %v1540 = vlog2.pop %v1539
        %v1541 = vmul.f32 %v1540, 0.6931472
        %v1542 = vmul.f32 -0.5, %v1494
        %v1543 = vadd.f32 %v1542, 1.0
        %v1544 = vmul.f32 %v1543, %v1494
        %v1545 = vand.u32 2147483647, %v1494
        %vm1546 = vcmp.lt.f32.partialorder %v1545, 0.0004427343
        %v1547 = vsel %vm1546, %v1544, %v1541
        %v1548 = vadd.f32 %v1496, 1.0
        %v1549 = vlog2.pop %v1548
        %v1550 = vmul.f32 %v1549, 0.6931472
        %v1551 = vmul.f32 -0.5, %v1496
        %v1552 = vadd.f32 %v1551, 1.0
        %v1553 = vmul.f32 %v1552, %v1496
        %v1554 = vand.u32 2147483647, %v1496
        %vm1555 = vcmp.lt.f32.partialorder %v1554, 0.0004427343
        %v1556 = vsel %vm1555, %v1553, %v1550
        %v1557 = vadd.f32 %v1498, 1.0
        %v1558 = vlog2.pop %v1557
        %v1559 = vmul.f32 %v1558, 0.6931472
        %v1560 = vmul.f32 -0.5, %v1498
        %v1561 = vadd.f32 %v1560, 1.0
        %v1562 = vmul.f32 %v1561, %v1498
        %v1563 = vand.u32 2147483647, %v1498
        %vm1564 = vcmp.lt.f32.partialorder %v1563, 0.0004427343
        %v1565 = vsel %vm1564, %v1562, %v1559
        %v1566 = vadd.f32 %v1500, 1.0
        %v1567 = vlog2.pop %v1566
        %v1568 = vmul.f32 %v1567, 0.6931472
        %v1569 = vmul.f32 -0.5, %v1500
        %v1570 = vadd.f32 %v1569, 1.0
        %v1571 = vmul.f32 %v1570, %v1500
        %v1572 = vand.u32 2147483647, %v1500
        %vm1573 = vcmp.lt.f32.partialorder %v1572, 0.0004427343
        %v1574 = vsel %vm1573, %v1571, %v1568
        %v1575 = vadd.f32 %v1502, 1.0
        %v1576 = vlog2.pop %v1575
        %v1577 = vmul.f32 %v1576, 0.6931472
        %v1578 = vmul.f32 -0.5, %v1502
        %v1579 = vadd.f32 %v1578, 1.0
        %v1580 = vmul.f32 %v1579, %v1502
        %v1581 = vand.u32 2147483647, %v1502
        %vm1582 = vcmp.lt.f32.partialorder %v1581, 0.0004427343
        %v1583 = vsel %vm1582, %v1580, %v1577
        %v1584 = vadd.f32 %v1504, 1.0
        %v1585 = vlog2.pop %v1584
        %v1586 = vmul.f32 %v1585, 0.6931472
        %v1587 = vmul.f32 -0.5, %v1504
        %v1588 = vadd.f32 %v1587, 1.0
        %v1589 = vmul.f32 %v1588, %v1504
        %v1590 = vand.u32 2147483647, %v1504
        %vm1591 = vcmp.lt.f32.partialorder %v1590, 0.0004427343
        %v1592 = vsel %vm1591, %v1589, %v1586
        %v1593 = vadd.f32 %v1506, 1.0
        %v1594 = vlog2.pop %v1593
        %v1595 = vmul.f32 %v1594, 0.6931472
        %v1596 = vmul.f32 -0.5, %v1506
        %v1597 = vadd.f32 %v1596, 1.0
        %v1598 = vmul.f32 %v1597, %v1506
        %v1599 = vand.u32 2147483647, %v1506
        %vm1600 = vcmp.lt.f32.partialorder %v1599, 0.0004427343
        %v1601 = vsel %vm1600, %v1598, %v1595
        %v1602 = vadd.f32 %v1508, 1.0
        %v1603 = vlog2.pop %v1602
        %v1604 = vmul.f32 %v1603, 0.6931472
        %v1605 = vmul.f32 -0.5, %v1508
        %v1606 = vadd.f32 %v1605, 1.0
        %v1607 = vmul.f32 %v1606, %v1508
        %v1608 = vand.u32 2147483647, %v1508
        %vm1609 = vcmp.lt.f32.partialorder %v1608, 0.0004427343
        %v1610 = vsel %vm1609, %v1607, %v1604
        %v1611 = vadd.f32 %v1510, 1.0
        %v1612 = vlog2.pop %v1611
        %v1613 = vmul.f32 %v1612, 0.6931472
        %v1614 = vmul.f32 -0.5, %v1510
        %v1615 = vadd.f32 %v1614, 1.0
        %v1616 = vmul.f32 %v1615, %v1510
        %v1617 = vand.u32 2147483647, %v1510
        %vm1618 = vcmp.lt.f32.partialorder %v1617, 0.0004427343
        %v1619 = vsel %vm1618, %v1616, %v1613
        %v1620 = vadd.f32 %v1512, 1.0
        %v1621 = vlog2.pop %v1620
        %v1622 = vmul.f32 %v1621, 0.6931472
        %v1623 = vmul.f32 -0.5, %v1512
        %v1624 = vadd.f32 %v1623, 1.0
        %v1625 = vmul.f32 %v1624, %v1512
        %v1626 = vand.u32 2147483647, %v1512
        %vm1627 = vcmp.lt.f32.partialorder %v1626, 0.0004427343
        %v1628 = vsel %vm1627, %v1625, %v1622
        %v1629 = vadd.f32 %v1514, 1.0
        %v1630 = vlog2.pop %v1629
        %v1631 = vmul.f32 %v1630, 0.6931472
        %v1632 = vmul.f32 -0.5, %v1514
        %v1633 = vadd.f32 %v1632, 1.0
        %v1634 = vmul.f32 %v1633, %v1514
        %v1635 = vand.u32 2147483647, %v1514
        %vm1636 = vcmp.lt.f32.partialorder %v1635, 0.0004427343
        %v1637 = vsel %vm1636, %v1634, %v1631
        %v1638 = vadd.f32 %v1516, 1.0
        %v1639 = vlog2.pop %v1638
        %v1640 = vmul.f32 %v1639, 0.6931472
        %v1641 = vmul.f32 -0.5, %v1516
        %v1642 = vadd.f32 %v1641, 1.0
        %v1643 = vmul.f32 %v1642, %v1516
        %v1644 = vand.u32 2147483647, %v1516
        %vm1645 = vcmp.lt.f32.partialorder %v1644, 0.0004427343
        %v1646 = vsel %vm1645, %v1643, %v1640
        %v1647 = vadd.f32 %v1518, 1.0
        %v1648 = vlog2.pop %v1647
        %v1649 = vmul.f32 %v1648, 0.6931472
        %v1650 = vmul.f32 -0.5, %v1518
        %v1651 = vadd.f32 %v1650, 1.0
        %v1652 = vmul.f32 %v1651, %v1518
        %v1653 = vand.u32 2147483647, %v1518
        %vm1654 = vcmp.lt.f32.partialorder %v1653, 0.0004427343
        %v1655 = vsel %vm1654, %v1652, %v1649
        %v1656 = vadd.f32 %v1520, 1.0
        %v1657 = vlog2.pop %v1656
        %v1658 = vmul.f32 %v1657, 0.6931472
        %v1659 = vmul.f32 -0.5, %v1520
        %v1660 = vadd.f32 %v1659, 1.0
        %v1661 = vmul.f32 %v1660, %v1520
        %v1662 = vand.u32 2147483647, %v1520
        %vm1663 = vcmp.lt.f32.partialorder %v1662, 0.0004427343
        %v1664 = vsel %vm1663, %v1661, %v1658
        %v1665 = vmul.f32 %v1529, 0.01
        %v1666 = vmul.f32 %v1538, 0.01
        %v1667 = vmul.f32 %v1547, 0.01
        %v1668 = vmul.f32 %v1556, 0.01
        %v1669 = vmul.f32 %v1565, 0.01
        %v1670 = vmul.f32 %v1574, 0.01
        %v1671 = vmul.f32 %v1583, 0.01
        %v1672 = vmul.f32 %v1592, 0.01
        %v1673 = vmul.f32 %v1601, 0.01
        %v1674 = vmul.f32 %v1610, 0.01
        %v1675 = vmul.f32 %v1619, 0.01
        %v1676 = vmul.f32 %v1628, 0.01
        %v1677 = vmul.f32 %v1637, 0.01
        %v1678 = vmul.f32 %v1646, 0.01
        %v1679 = vmul.f32 %v1655, 0.01
        %v1680 = vmul.f32 %v1664, 0.01
        %vm1681 = vcmp.gt.f32.partialorder %v1457, 20.0
        %vm1682 = vcmp.gt.f32.partialorder %v1458, 20.0
        %vm1683 = vcmp.gt.f32.partialorder %v1459, 20.0
        %vm1684 = vcmp.gt.f32.partialorder %v1460, 20.0
        %vm1685 = vcmp.gt.f32.partialorder %v1461, 20.0
        %vm1686 = vcmp.gt.f32.partialorder %v1462, 20.0
        %vm1687 = vcmp.gt.f32.partialorder %v1463, 20.0
        %vm1688 = vcmp.gt.f32.partialorder %v1464, 20.0
        %vm1689 = vcmp.gt.f32.partialorder %v1465, 20.0
        %vm1690 = vcmp.gt.f32.partialorder %v1466, 20.0
        %vm1691 = vcmp.gt.f32.partialorder %v1467, 20.0
        %vm1692 = vcmp.gt.f32.partialorder %v1468, 20.0
        %vm1693 = vcmp.gt.f32.partialorder %v1469, 20.0
        %vm1694 = vcmp.gt.f32.partialorder %v1470, 20.0
        %vm1695 = vcmp.gt.f32.partialorder %v1471, 20.0
        %vm1696 = vcmp.gt.f32.partialorder %v1472, 20.0
        %v1697 = vsel %vm1681, %v1410, %v1665
        %v1698 = vsel %vm1682, %v1413, %v1666
        %v1699 = vsel %vm1683, %v1416, %v1667
        %v1700 = vsel %vm1684, %v1419, %v1668
        %v1701 = vsel %vm1685, %v1422, %v1669
        %v1702 = vsel %vm1686, %v1425, %v1670
        %v1703 = vsel %vm1687, %v1428, %v1671
        %v1704 = vsel %vm1688, %v1431, %v1672
        %v1705 = vsel %vm1689, %v1434, %v1673
        %v1706 = vsel %vm1690, %v1437, %v1674
        %v1707 = vsel %vm1691, %v1440, %v1675
        %v1708 = vsel %vm1692, %v1443, %v1676
        %v1709 = vsel %vm1693, %v1446, %v1677
        %v1710 = vsel %vm1694, %v1449, %v1678
        %v1711 = vsel %vm1695, %v1452, %v1679
        %v1712 = vsel %vm1696, %v1455, %v1680
        %s1713 = scalar_lea.vmem [#allocation2], 384
        %v1714 = vld [vmem:[%s1713] sm:$0xff]
        %v1715 = vld [vmem:[%s1713 + $0x8] sm:$0xff]
        %v1716 = vld [vmem:[%s1713 + $0x10] sm:$0xff]
        %v1717 = vld [vmem:[%s1713 + $0x18] sm:$0xff]
        %v1718 = vld [vmem:[%s1713 + $0x20] sm:$0xff]
        %v1719 = vld [vmem:[%s1713 + $0x28] sm:$0xff]
        %v1720 = vld [vmem:[%s1713 + $0x30] sm:$0xff]
        %v1721 = vld [vmem:[%s1713 + $0x38] sm:$0xff]
        %v1722 = vld [vmem:[%s1713 + $0x40] sm:$0xff]
        %v1723 = vld [vmem:[%s1713 + $0x48] sm:$0xff]
        %v1724 = vld [vmem:[%s1713 + $0x50] sm:$0xff]
        %v1725 = vld [vmem:[%s1713 + $0x58] sm:$0xff]
        %v1726 = vld [vmem:[%s1713 + $0x60] sm:$0xff]
        %v1727 = vld [vmem:[%s1713 + $0x68] sm:$0xff]
        %v1728 = vld [vmem:[%s1713 + $0x70] sm:$0xff]
        %v1729 = vld [vmem:[%s1713 + $0x78] sm:$0xff]
        %v1730 = vperm.slane %v232, 4
        %1731 = vmatpush.msra.mxu0 %v1729
        %1732 = vmatpush.msra.mxu0 %v1728
        %1733 = vmatpush.msra.mxu0 %v1727
        %1734 = vmatpush.msra.mxu0 %v1726
        %1735 = vmatpush.msra.mxu0 %v1725
        %1736 = vmatpush.msra.mxu0 %v1724
        %1737 = vmatpush.msra.mxu0 %v1723
        %1738 = vmatpush.msra.mxu0 %v1722
        %1739 = vmatpush.msra.mxu0 %v1721
        %1740 = vmatpush.msra.mxu0 %v1720
        %1741 = vmatpush.msra.mxu0 %v1719
        %1742 = vmatpush.msra.mxu0 %v1718
        %1743 = vmatpush.msra.mxu0 %v1717
        %1744 = vmatpush.msra.mxu0 %v1716
        %1745 = vmatpush.msra.mxu0 %v1715
        %1746 = vmatpush.msra.mxu0 %v1714
        %1747 = vmatmul.f32.gmra.mxu0 %v1697
        %v1748 = vpop.f32.mrf.mxu0
        %v1749 = vadd.f32 %v1730, %v1748
        %1750 = vmatmul.f32.gmra.mxu0 %v1698
        %v1751 = vpop.f32.mrf.mxu0
        %v1752 = vadd.f32 %v1730, %v1751
        %1753 = vmatmul.f32.gmra.mxu0 %v1699
        %v1754 = vpop.f32.mrf.mxu0
        %v1755 = vadd.f32 %v1730, %v1754
        %1756 = vmatmul.f32.gmra.mxu0 %v1700
        %v1757 = vpop.f32.mrf.mxu0
        %v1758 = vadd.f32 %v1730, %v1757
        %1759 = vmatmul.f32.gmra.mxu0 %v1701
        %v1760 = vpop.f32.mrf.mxu0
        %v1761 = vadd.f32 %v1730, %v1760
        %1762 = vmatmul.f32.gmra.mxu0 %v1702
        %v1763 = vpop.f32.mrf.mxu0
        %v1764 = vadd.f32 %v1730, %v1763
        %1765 = vmatmul.f32.gmra.mxu0 %v1703
        %v1766 = vpop.f32.mrf.mxu0
        %v1767 = vadd.f32 %v1730, %v1766
        %1768 = vmatmul.f32.gmra.mxu0 %v1704
        %v1769 = vpop.f32.mrf.mxu0
        %v1770 = vadd.f32 %v1730, %v1769
        %1771 = vmatmul.f32.gmra.mxu0 %v1705
        %v1772 = vpop.f32.mrf.mxu0
        %v1773 = vadd.f32 %v1730, %v1772
        %1774 = vmatmul.f32.gmra.mxu0 %v1706
        %v1775 = vpop.f32.mrf.mxu0
        %v1776 = vadd.f32 %v1730, %v1775
        %1777 = vmatmul.f32.gmra.mxu0 %v1707
        %v1778 = vpop.f32.mrf.mxu0
        %v1779 = vadd.f32 %v1730, %v1778
        %1780 = vmatmul.f32.gmra.mxu0 %v1708
        %v1781 = vpop.f32.mrf.mxu0
        %v1782 = vadd.f32 %v1730, %v1781
        %1783 = vmatmul.f32.gmra.mxu0 %v1709
        %v1784 = vpop.f32.mrf.mxu0
        %v1785 = vadd.f32 %v1730, %v1784
        %1786 = vmatmul.f32.gmra.mxu0 %v1710
        %v1787 = vpop.f32.mrf.mxu0
        %v1788 = vadd.f32 %v1730, %v1787
        %1789 = vmatmul.f32.gmra.mxu0 %v1711
        %v1790 = vpop.f32.mrf.mxu0
        %v1791 = vadd.f32 %v1730, %v1790
        %1792 = vmatmul.f32.gmra.mxu0 %v1712
        %v1793 = vpop.f32.mrf.mxu0
        %v1794 = vadd.f32 %v1730, %v1793
        %1795 = vdwg.mxu0
        %1796 = vst [vmem:[%s208] sm:$0xff] %v1749
        %1797 = vst [vmem:[%s208 + $0x8] sm:$0xff] %v1752
        %1798 = vst [vmem:[%s208 + $0x10] sm:$0xff] %v1755
        %1799 = vst [vmem:[%s208 + $0x18] sm:$0xff] %v1758
        %1800 = vst [vmem:[%s208 + $0x20] sm:$0xff] %v1761
        %1801 = vst [vmem:[%s208 + $0x28] sm:$0xff] %v1764
        %1802 = vst [vmem:[%s208 + $0x30] sm:$0xff] %v1767
        %1803 = vst [vmem:[%s208 + $0x38] sm:$0xff] %v1770
        %1804 = vst [vmem:[%s208 + $0x40] sm:$0xff] %v1773
        %1805 = vst [vmem:[%s208 + $0x48] sm:$0xff] %v1776
        %1806 = vst [vmem:[%s208 + $0x50] sm:$0xff] %v1779
        %1807 = vst [vmem:[%s208 + $0x58] sm:$0xff] %v1782
        %1808 = vst [vmem:[%s208 + $0x60] sm:$0xff] %v1785
        %1809 = vst [vmem:[%s208 + $0x68] sm:$0xff] %v1788
        %1810 = vst [vmem:[%s208 + $0x70] sm:$0xff] %v1791
        %1811 = vst [vmem:[%s208 + $0x78] sm:$0xff] %v1794
        %s1812 = sand.u32 %s116, 1
        %s1813 = scalar_lea.sflag [#allocation4], %s1812
        %s1814 = sand.u32 %s116, 1
        %s1815 = smul.addr %s1814, 128
        %s1816 = scalar_lea.vmem [#allocation5], %s1815
        // Predicated region
        $region41: #{tpu_custom_call.1} parent=35 // pred_check
          %p1817 = pneg %p126
        $region42: #{tpu_custom_call.1} parent=35 // pred_check_branch
          %1819 = sbr.rel (%p1817) target = $region44
        $region43: #{tpu_custom_call.1} parent=35 // pred_region
          %s1820 = smul.u32 16, %s19
          %1822 = vsyncadd %s1813, 0
          %s1823 = smul.addr %s1820, 8
          %s1824 = scalar_lea.hbm %s4, %s1823
          %s1825 = sshll.u32 %s1816, 4
          %s1826 = int_to_ptr.vmem [resolvable:$true] %s1825
          %s1827 = sshll.u32 %s1824, 4
          %s1828 = int_to_ptr.hbm [resolvable:$true] %s1827
          %1833 = dma.vmem_to_hbm [thread:$0]  %s1826, 2048, %s1828, %s1813, 128, 128, 8
        $region44: #{tpu_custom_call.1} parent=35 // pred_fallthru
          _
      $region36: #{tpu_custom_call.1} parent=5 // pred_fallthru
        _
      %p1834 = scmp.le.s32.totalorder 2, %s14
      // Predicated region
      $region45: #{tpu_custom_call.1} parent=5 // pred_check
        %p1835 = pneg %p1834
      $region46: #{tpu_custom_call.1} parent=5 // pred_check_branch
        %1837 = sbr.rel (%p1835) target = $region48
      $region47: #{tpu_custom_call.1} parent=5 // pred_region
        %s1838 = ssub.s32 %s14, 2
        // Predicated region
        $region49: #{tpu_custom_call.1} parent=47 // pred_check
          %p1839 = pneg %p132
        $region50: #{tpu_custom_call.1} parent=47 // pred_check_branch
          %1841 = sbr.rel (%p1839) target = $region52
        $region51: #{tpu_custom_call.1} parent=47 // pred_region
          %s1842 = sand.u32 %s117, 1
          %s1843 = scalar_lea.sflag [#allocation4], %s1842
          %s1844 = sand.u32 %s117, 1
          %s1845 = smul.addr %s1844, 128
          %s1846 = scalar_lea.vmem [#allocation5], %s1845
          %1848 = dma.done %s1843, 2048
        $region52: #{tpu_custom_call.1} parent=47 // pred_fallthru
          _
      $region48: #{tpu_custom_call.1} parent=5 // pred_fallthru
        _
    $region6: #{tpu_custom_call.1} parent=1 // loop_footer
      %s18 = sadd.s32 1, %s14
    $region7: #{tpu_custom_call.1} parent=1 // loop_footer_branch
      %13 = sbr.rel target = $region3
    $region8: #{tpu_custom_call.1} parent=1 // loop_exit
      _
    %1849 = vsyncpa [#allocation3], 1
    %s1850 = scalar_lea.sflag [#allocation3], 1
    %1851 = vsyncpa %s1850, 1
    %1852 = vsyncpa [#allocation4], 1
    %s1853 = scalar_lea.sflag [#allocation4], 1
    %1854 = vsyncpa %s1853, 1

</llo_original>
